<compile_context>
chip_gen: v7x
topology: tpu7x:2x2x1
jax: 0.10.0
libtpu: 0.0.40
codegen_flags: <defaults>
</compile_context>

<pallas_src>
import jax
import jax.numpy as jnp
from jax.experimental import pallas as pl
from jax.experimental.pallas import tpu as pltpu


def _gnn_encoder_kernel(a_ref, x_ref,
                        w1r_ref, w1s_ref, b1_ref,
                        w2r_ref, w2s_ref, b2_ref,
                        w3r_ref, w3s_ref, b3_ref,
                        o_ref):
    # a_ref: (Np, Np) dense weighted adjacency (A[dst, src] = edge_weight sum)
    # x_ref: (Np, Fp) node features; weights are (in, out); biases (1, out).
    a = a_ref[...]
    x = x_ref[...]

    def graph_conv(h, wr_ref, ws_ref, b_ref):
        # sum-aggregation of weighted neighbour features == A @ h  (MXU)
        agg = jnp.dot(a, h, preferred_element_type=jnp.float32)
        return (jnp.dot(agg, wr_ref[...], preferred_element_type=jnp.float32)
                + jnp.dot(h, ws_ref[...], preferred_element_type=jnp.float32)
                + b_ref[...])

    h = jnp.maximum(graph_conv(x, w1r_ref, w1s_ref, b1_ref), 0.0)   # conv1 + relu
    h = jnp.maximum(graph_conv(h, w2r_ref, w2s_ref, b2_ref), 0.0)   # conv2 + relu
    o = graph_conv(h, w3r_ref, w3s_ref, b3_ref)                     # conv3
    # nn.Dropout(0.2) is the identity in eval mode.
    o_ref[...] = o.astype(o_ref.dtype)


def _pad_to(n, m):
    return ((n + m - 1) // m) * m


def gnn_encoder(x, edge_index, edge_weight, params):
    """Pallas implementation of GNNEncoder.forward (eval mode).

    x:           (N, F_in) float32 node features
    edge_index:  (2, E) int32, row 0 = source nodes, row 1 = target nodes
    edge_weight: (E,) float32
    params: {"conv1": {"w_rel": (F_in,H), "w_root": (F_in,H), "b_rel": (H,)},
             "conv2": {...(H,H)...}, "conv3": {...(H,C)...}}
    returns: (N, C) float32
    """
    N, F_in = x.shape
    H = params["conv1"]["w_rel"].shape[1]
    C = params["conv3"]["w_rel"].shape[1]

    # Glue: build the dense weighted adjacency (scatter-add over edges).
    src, dst = edge_index[0], edge_index[1]
    adj = jnp.zeros((N, N), jnp.float32).at[dst, src].add(
        edge_weight.astype(jnp.float32))

    # Pad node dim + all feature dims to lane multiples (128) -> MXU-aligned
    # matmuls, full-vreg VPU ops, lane-dense output stores.
    Np = _pad_to(N, 128)
    Fp = _pad_to(F_in, 128)
    Hp = _pad_to(H, 128)
    Cp = _pad_to(C, 128)

    adj_p = jnp.zeros((Np, Np), jnp.float32).at[:N, :N].set(adj)
    x_p = jnp.zeros((Np, Fp), jnp.float32).at[:N, :F_in].set(
        x.astype(jnp.float32))

    def pad_mat(w, rp, cp):
        r, c = w.shape
        return jnp.zeros((rp, cp), jnp.float32).at[:r, :c].set(
            w.astype(jnp.float32))

    def pad_bias(b, cp):
        return jnp.zeros((1, cp), jnp.float32).at[0, :b.shape[0]].set(
            b.astype(jnp.float32))

    w1r = pad_mat(params["conv1"]["w_rel"], Fp, Hp)
    w1s = pad_mat(params["conv1"]["w_root"], Fp, Hp)
    b1 = pad_bias(params["conv1"]["b_rel"], Hp)
    w2r = pad_mat(params["conv2"]["w_rel"], Hp, Hp)
    w2s = pad_mat(params["conv2"]["w_root"], Hp, Hp)
    b2 = pad_bias(params["conv2"]["b_rel"], Hp)
    w3r = pad_mat(params["conv3"]["w_rel"], Hp, Cp)
    w3s = pad_mat(params["conv3"]["w_root"], Hp, Cp)
    b3 = pad_bias(params["conv3"]["b_rel"], Cp)

    def full(shape):
        return pl.BlockSpec(shape, lambda i, _s=shape: (0,) * len(_s))

    out = pl.pallas_call(
        _gnn_encoder_kernel,
        out_shape=jax.ShapeDtypeStruct((Np, Cp), jnp.float32),
        grid_spec=pltpu.PrefetchScalarGridSpec(
            num_scalar_prefetch=0,
            grid=(1,),  # whole (padded) graph in one step: no per-step overhead
            in_specs=[
                full((Np, Np)),                                   # adjacency
                full((Np, Fp)),                                   # features
                full((Fp, Hp)), full((Fp, Hp)), full((1, Hp)),    # conv1
                full((Hp, Hp)), full((Hp, Hp)), full((1, Hp)),    # conv2
                full((Hp, Cp)), full((Hp, Cp)), full((1, Cp)),    # conv3
            ],
            out_specs=full((Np, Cp)),
        ),
        compiler_params=pltpu.CompilerParams(
            dimension_semantics=("arbitrary",)),
    )(adj_p, x_p, w1r, w1s, b1, w2r, w2s, b2, w3r, w3s, b3)

    return out[:N, :C]


def _reference(x, edge_index, edge_weight, params):
    N = x.shape[0]
    src, dst = edge_index[0], edge_index[1]
    A = jnp.zeros((N, N), jnp.float32).at[dst, src].add(edge_weight)

    def conv(h, p):
        agg = A @ h
        return agg @ p["w_rel"] + p["b_rel"] + h @ p["w_root"]

    h = jnp.maximum(conv(x, params["conv1"]), 0.0)
    h = jnp.maximum(conv(h, params["conv2"]), 0.0)
    return conv(h, params["conv3"])      # dropout = identity in eval mode


if __name__ == "__main__":
    N = 22        # number of nodes
    F_IN = 16     # input feature dim
    H = 32        # hidden_channels
    C = 16        # out_channels
    E = 64        # number of edges

    key = jax.random.PRNGKey(0)
    ks = jax.random.split(key, 12)

    x = jax.random.normal(ks[0], (N, F_IN), dtype=jnp.float32)
    src = jax.random.randint(ks[1], (E,), 0, N, dtype=jnp.int32)
    dst = jax.random.randint(ks[2], (E,), 0, N, dtype=jnp.int32)
    edge_index = jnp.stack([src, dst], axis=0)
    edge_weight = jax.random.uniform(ks[3], (E,), dtype=jnp.float32)

    def lin(k, fan_in, fan_out):
        return jax.random.normal(k, (fan_in, fan_out), dtype=jnp.float32) * 0.1

    params = {
        "conv1": {"w_rel": lin(ks[4], F_IN, H), "w_root": lin(ks[5], F_IN, H),
                  "b_rel": jax.random.normal(ks[6], (H,), jnp.float32) * 0.1},
        "conv2": {"w_rel": lin(ks[7], H, H), "w_root": lin(ks[8], H, H),
                  "b_rel": jax.random.normal(ks[9], (H,), jnp.float32) * 0.1},
        "conv3": {"w_rel": lin(ks[10], H, C), "w_root": lin(ks[11], H, C),
                  "b_rel": jnp.zeros((C,), jnp.float32)},
    }

    out = gnn_encoder(x, edge_index, edge_weight, params)
    out = jax.block_until_ready(out)

    ref = _reference(x, edge_index, edge_weight, params)
    assert out.shape == (N, C)
    assert jnp.allclose(out, ref, atol=1e-2, rtol=1e-2), \
        float(jnp.max(jnp.abs(out - ref)))
    print("KERNEL_OK")
</pallas_src>

<mosaic_0001>
module attributes {stable_mosaic.version = 11 : i64} {
  func.func @_gnn_encoder_kernel(%arg0: i32, %arg1: memref<128x128xf32, #tpu.memory_space<vmem>>, %arg2: memref<128x128xf32, #tpu.memory_space<vmem>>, %arg3: memref<128x128xf32, #tpu.memory_space<vmem>>, %arg4: memref<128x128xf32, #tpu.memory_space<vmem>>, %arg5: memref<1x128xf32, #tpu.memory_space<vmem>>, %arg6: memref<128x128xf32, #tpu.memory_space<vmem>>, %arg7: memref<128x128xf32, #tpu.memory_space<vmem>>, %arg8: memref<1x128xf32, #tpu.memory_space<vmem>>, %arg9: memref<128x128xf32, #tpu.memory_space<vmem>>, %arg10: memref<128x128xf32, #tpu.memory_space<vmem>>, %arg11: memref<1x128xf32, #tpu.memory_space<vmem>>, %arg12: memref<128x128xf32, #tpu.memory_space<vmem>>) attributes {dimension_semantics = [#tpu.dimension_semantics<arbitrary>], iteration_bounds = array<i64: 1>, scalar_prefetch = 0 : i64, scratch_operands = 0 : i64, tpu.core_type = #tpu.core_type<tc>, window_params = [{pipeline_mode = #tpu.pipeline_mode<synchronous>, transform_indices = @transform_0, window_bounds = array<i64: 128, 128>}, {pipeline_mode = #tpu.pipeline_mode<synchronous>, transform_indices = @transform_1, window_bounds = array<i64: 128, 128>}, {pipeline_mode = #tpu.pipeline_mode<synchronous>, transform_indices = @transform_2, window_bounds = array<i64: 128, 128>}, {pipeline_mode = #tpu.pipeline_mode<synchronous>, transform_indices = @transform_3, window_bounds = array<i64: 128, 128>}, {pipeline_mode = #tpu.pipeline_mode<synchronous>, transform_indices = @transform_4, window_bounds = array<i64: 1, 128>}, {pipeline_mode = #tpu.pipeline_mode<synchronous>, transform_indices = @transform_5, window_bounds = array<i64: 128, 128>}, {pipeline_mode = #tpu.pipeline_mode<synchronous>, transform_indices = @transform_6, window_bounds = array<i64: 128, 128>}, {pipeline_mode = #tpu.pipeline_mode<synchronous>, transform_indices = @transform_7, window_bounds = array<i64: 1, 128>}, {pipeline_mode = #tpu.pipeline_mode<synchronous>, transform_indices = @transform_8, window_bounds = array<i64: 128, 128>}, {pipeline_mode = #tpu.pipeline_mode<synchronous>, transform_indices = @transform_9, window_bounds = array<i64: 128, 128>}, {pipeline_mode = #tpu.pipeline_mode<synchronous>, transform_indices = @transform_10, window_bounds = array<i64: 1, 128>}, {pipeline_mode = #tpu.pipeline_mode<synchronous>, transform_indices = @transform_11, window_bounds = array<i64: 128, 128>}]} {
    %c0 = arith.constant 0 : index
    %c0_0 = arith.constant 0 : index
    %0 = vector.load %arg1[%c0, %c0_0] : memref<128x128xf32, #tpu.memory_space<vmem>>, vector<128x128xf32>
    %c0_1 = arith.constant 0 : index
    %c0_2 = arith.constant 0 : index
    %1 = vector.load %arg2[%c0_1, %c0_2] : memref<128x128xf32, #tpu.memory_space<vmem>>, vector<128x128xf32>
    %cst = arith.constant dense<0.000000e+00> : vector<128x128xf32>
    %2 = tpu.matmul %0, %1, %cst {dimension_numbers = #tpu.dot_dimension_numbers<[1], [0], [0], [1], [0, 0, 1, 1], [], []>} : vector<128x128xf32>, vector<128x128xf32>, vector<128x128xf32> -> vector<128x128xf32>
    %c0_3 = arith.constant 0 : index
    %c0_4 = arith.constant 0 : index
    %3 = vector.load %arg3[%c0_3, %c0_4] : memref<128x128xf32, #tpu.memory_space<vmem>>, vector<128x128xf32>
    %cst_5 = arith.constant dense<0.000000e+00> : vector<128x128xf32>
    %4 = tpu.matmul %2, %3, %cst_5 {dimension_numbers = #tpu.dot_dimension_numbers<[1], [0], [0], [1], [0, 0, 1, 1], [], []>} : vector<128x128xf32>, vector<128x128xf32>, vector<128x128xf32> -> vector<128x128xf32>
    %c0_6 = arith.constant 0 : index
    %c0_7 = arith.constant 0 : index
    %5 = vector.load %arg4[%c0_6, %c0_7] : memref<128x128xf32, #tpu.memory_space<vmem>>, vector<128x128xf32>
    %cst_8 = arith.constant dense<0.000000e+00> : vector<128x128xf32>
    %6 = tpu.matmul %1, %5, %cst_8 {dimension_numbers = #tpu.dot_dimension_numbers<[1], [0], [0], [1], [0, 0, 1, 1], [], []>} : vector<128x128xf32>, vector<128x128xf32>, vector<128x128xf32> -> vector<128x128xf32>
    %7 = arith.addf %4, %6 : vector<128x128xf32>
    %c0_9 = arith.constant 0 : index
    %c0_10 = arith.constant 0 : index
    %8 = vector.load %arg5[%c0_9, %c0_10] : memref<1x128xf32, #tpu.memory_space<vmem>>, vector<1x128xf32>
    %9 = vector.broadcast %8 : vector<1x128xf32> to vector<128x128xf32>
    %10 = arith.addf %7, %9 : vector<128x128xf32>
    %cst_11 = arith.constant 0.000000e+00 : f32
    %11 = vector.broadcast %cst_11 : f32 to vector<128x128xf32>
    %12 = arith.maximumf %10, %11 : vector<128x128xf32>
    %cst_12 = arith.constant dense<0.000000e+00> : vector<128x128xf32>
    %13 = tpu.matmul %0, %12, %cst_12 {dimension_numbers = #tpu.dot_dimension_numbers<[1], [0], [0], [1], [0, 0, 1, 1], [], []>} : vector<128x128xf32>, vector<128x128xf32>, vector<128x128xf32> -> vector<128x128xf32>
    %c0_13 = arith.constant 0 : index
    %c0_14 = arith.constant 0 : index
    %14 = vector.load %arg6[%c0_13, %c0_14] : memref<128x128xf32, #tpu.memory_space<vmem>>, vector<128x128xf32>
    %cst_15 = arith.constant dense<0.000000e+00> : vector<128x128xf32>
    %15 = tpu.matmul %13, %14, %cst_15 {dimension_numbers = #tpu.dot_dimension_numbers<[1], [0], [0], [1], [0, 0, 1, 1], [], []>} : vector<128x128xf32>, vector<128x128xf32>, vector<128x128xf32> -> vector<128x128xf32>
    %c0_16 = arith.constant 0 : index
    %c0_17 = arith.constant 0 : index
    %16 = vector.load %arg7[%c0_16, %c0_17] : memref<128x128xf32, #tpu.memory_space<vmem>>, vector<128x128xf32>
    %cst_18 = arith.constant dense<0.000000e+00> : vector<128x128xf32>
    %17 = tpu.matmul %12, %16, %cst_18 {dimension_numbers = #tpu.dot_dimension_numbers<[1], [0], [0], [1], [0, 0, 1, 1], [], []>} : vector<128x128xf32>, vector<128x128xf32>, vector<128x128xf32> -> vector<128x128xf32>
    %18 = arith.addf %15, %17 : vector<128x128xf32>
    %c0_19 = arith.constant 0 : index
    %c0_20 = arith.constant 0 : index
    %19 = vector.load %arg8[%c0_19, %c0_20] : memref<1x128xf32, #tpu.memory_space<vmem>>, vector<1x128xf32>
    %20 = vector.broadcast %19 : vector<1x128xf32> to vector<128x128xf32>
    %21 = arith.addf %18, %20 : vector<128x128xf32>
    %cst_21 = arith.constant 0.000000e+00 : f32
    %22 = vector.broadcast %cst_21 : f32 to vector<128x128xf32>
    %23 = arith.maximumf %21, %22 : vector<128x128xf32>
    %cst_22 = arith.constant dense<0.000000e+00> : vector<128x128xf32>
    %24 = tpu.matmul %0, %23, %cst_22 {dimension_numbers = #tpu.dot_dimension_numbers<[1], [0], [0], [1], [0, 0, 1, 1], [], []>} : vector<128x128xf32>, vector<128x128xf32>, vector<128x128xf32> -> vector<128x128xf32>
    %c0_23 = arith.constant 0 : index
    %c0_24 = arith.constant 0 : index
    %25 = vector.load %arg9[%c0_23, %c0_24] : memref<128x128xf32, #tpu.memory_space<vmem>>, vector<128x128xf32>
    %cst_25 = arith.constant dense<0.000000e+00> : vector<128x128xf32>
    %26 = tpu.matmul %24, %25, %cst_25 {dimension_numbers = #tpu.dot_dimension_numbers<[1], [0], [0], [1], [0, 0, 1, 1], [], []>} : vector<128x128xf32>, vector<128x128xf32>, vector<128x128xf32> -> vector<128x128xf32>
    %c0_26 = arith.constant 0 : index
    %c0_27 = arith.constant 0 : index
    %27 = vector.load %arg10[%c0_26, %c0_27] : memref<128x128xf32, #tpu.memory_space<vmem>>, vector<128x128xf32>
    %cst_28 = arith.constant dense<0.000000e+00> : vector<128x128xf32>
    %28 = tpu.matmul %23, %27, %cst_28 {dimension_numbers = #tpu.dot_dimension_numbers<[1], [0], [0], [1], [0, 0, 1, 1], [], []>} : vector<128x128xf32>, vector<128x128xf32>, vector<128x128xf32> -> vector<128x128xf32>
    %29 = arith.addf %26, %28 : vector<128x128xf32>
    %c0_29 = arith.constant 0 : index
    %c0_30 = arith.constant 0 : index
    %30 = vector.load %arg11[%c0_29, %c0_30] : memref<1x128xf32, #tpu.memory_space<vmem>>, vector<1x128xf32>
    %31 = vector.broadcast %30 : vector<1x128xf32> to vector<128x128xf32>
    %32 = arith.addf %29, %31 : vector<128x128xf32>
    %c0_31 = arith.constant 0 : index
    %c0_32 = arith.constant 0 : index
    %33 = vector.load %arg12[%c0_31, %c0_32] : memref<128x128xf32, #tpu.memory_space<vmem>>, vector<128x128xf32>
    tpu.vector_store %arg12[%c0_31, %c0_32], %32 {strides = array<i32>} : memref<128x128xf32, #tpu.memory_space<vmem>>, vector<128x128xf32>,
    return
  }
  func.func @transform_0(%arg0: i32) -> (i32, i32) {
    %c0_i32 = arith.constant 0 : i32
    %c0_i32_0 = arith.constant 0 : i32
    %c0_i32_1 = arith.constant 0 : i32
    return %c0_i32, %c0_i32_0 : i32, i32
  }
  func.func @transform_1(%arg0: i32) -> (i32, i32) {
    %c0_i32 = arith.constant 0 : i32
    %c0_i32_0 = arith.constant 0 : i32
    %c0_i32_1 = arith.constant 0 : i32
    return %c0_i32, %c0_i32_0 : i32, i32
  }
  func.func @transform_2(%arg0: i32) -> (i32, i32) {
    %c0_i32 = arith.constant 0 : i32
    %c0_i32_0 = arith.constant 0 : i32
    %c0_i32_1 = arith.constant 0 : i32
    return %c0_i32, %c0_i32_0 : i32, i32
  }
  func.func @transform_3(%arg0: i32) -> (i32, i32) {
    %c0_i32 = arith.constant 0 : i32
    %c0_i32_0 = arith.constant 0 : i32
    %c0_i32_1 = arith.constant 0 : i32
    return %c0_i32, %c0_i32_0 : i32, i32
  }
  func.func @transform_4(%arg0: i32) -> (i32, i32) {
    %c0_i32 = arith.constant 0 : i32
    %c0_i32_0 = arith.constant 0 : i32
    %c0_i32_1 = arith.constant 0 : i32
    return %c0_i32, %c0_i32_0 : i32, i32
  }
  func.func @transform_5(%arg0: i32) -> (i32, i32) {
    %c0_i32 = arith.constant 0 : i32
    %c0_i32_0 = arith.constant 0 : i32
    %c0_i32_1 = arith.constant 0 : i32
    return %c0_i32, %c0_i32_0 : i32, i32
  }
  func.func @transform_6(%arg0: i32) -> (i32, i32) {
    %c0_i32 = arith.constant 0 : i32
    %c0_i32_0 = arith.constant 0 : i32
    %c0_i32_1 = arith.constant 0 : i32
    return %c0_i32, %c0_i32_0 : i32, i32
  }
  func.func @transform_7(%arg0: i32) -> (i32, i32) {
    %c0_i32 = arith.constant 0 : i32
    %c0_i32_0 = arith.constant 0 : i32
    %c0_i32_1 = arith.constant 0 : i32
    return %c0_i32, %c0_i32_0 : i32, i32
  }
  func.func @transform_8(%arg0: i32) -> (i32, i32) {
    %c0_i32 = arith.constant 0 : i32
    %c0_i32_0 = arith.constant 0 : i32
    %c0_i32_1 = arith.constant 0 : i32
    return %c0_i32, %c0_i32_0 : i32, i32
  }
  func.func @transform_9(%arg0: i32) -> (i32, i32) {
    %c0_i32 = arith.constant 0 : i32
    %c0_i32_0 = arith.constant 0 : i32
    %c0_i32_1 = arith.constant 0 : i32
    return %c0_i32, %c0_i32_0 : i32, i32
  }
  func.func @transform_10(%arg0: i32) -> (i32, i32) {
    %c0_i32 = arith.constant 0 : i32
    %c0_i32_0 = arith.constant 0 : i32
    %c0_i32_1 = arith.constant 0 : i32
    return %c0_i32, %c0_i32_0 : i32, i32
  }
  func.func @transform_11(%arg0: i32) -> (i32, i32) {
    %c0_i32 = arith.constant 0 : i32
    %c0_i32_0 = arith.constant 0 : i32
    %c0_i32_1 = arith.constant 0 : i32
    return %c0_i32, %c0_i32_0 : i32, i32
  }
}

</mosaic_0001>

<llo_original>
// kernel: tpu_custom_call.1
$region0: #{tpu_custom_call.1}
  #allocation0 [shape = 'u32[]', space=smem, size = 0x4, offset = 0x4, fixed_abs, tag = 'smem constant byte address 0x4 - core index']
  #allocation1 [shape = 'u32[144,128]{1,0:T(1,128)}', space=vmem, size = 0x12000, scoped, tag = 'internal scratch']
  %s0 = inlined_call_operand.hbm [shape: f32[128,128], index: 0, kind: input, shape index: {}]
  %s1 = inlined_call_operand.hbm [shape: f32[128,128], index: 1, kind: input, shape index: {}]
  %s2 = inlined_call_operand.hbm [shape: f32[128,128], index: 2, kind: input, shape index: {}]
  %s3 = inlined_call_operand.hbm [shape: f32[128,128], index: 3, kind: input, shape index: {}]
  %s4 = inlined_call_operand.vmem [shape: f32[1,128], index: 4, kind: input, shape index: {}]
  %s5 = inlined_call_operand.hbm [shape: f32[128,128], index: 5, kind: input, shape index: {}]
  %s6 = inlined_call_operand.hbm [shape: f32[128,128], index: 6, kind: input, shape index: {}]
  %s7 = inlined_call_operand.vmem [shape: f32[1,128], index: 7, kind: input, shape index: {}]
  %s8 = inlined_call_operand.hbm [shape: f32[128,128], index: 8, kind: input, shape index: {}]
  %s9 = inlined_call_operand.hbm [shape: f32[128,128], index: 9, kind: input, shape index: {}]
  %s10 = inlined_call_operand.vmem [shape: f32[1,128], index: 10, kind: input, shape index: {}]
  %s11 = inlined_call_operand.hbm [shape: f32[128,128], index: 11, kind: output, shape index: {}]
  %s12 = sld [smem:[#allocation0]]
  $region86: #{tpu_custom_call.1} parent=0
    _
  %s14 = ssub.s32 1, %s12
  %s15 = scalar_select 0, %s14, %s12
  $region1: #{tpu_custom_call.1} parent=0
    #allocation2 [shape = 'u8[65536]{0}', space=vmem, size = 0x10000, scoped, tag = 'input window, operand 0, single buffered']
    #allocation3 [shape = 's32[1]{0}', space=sflag, size = 0x4, scoped, tag = 'scoped memory for tpu_custom_call.1']
    #allocation4 [shape = 's32[1]{0}', space=sflag, size = 0x4, scoped, tag = 'scoped memory for tpu_custom_call.1']
    #allocation5 [shape = 'u8[65536]{0}', space=vmem, size = 0x10000, scoped, tag = 'input window, operand 1, single buffered']
    #allocation6 [shape = 's32[1]{0}', space=sflag, size = 0x4, scoped, tag = 'scoped memory for tpu_custom_call.1']
    #allocation7 [shape = 'u8[65536]{0}', space=vmem, size = 0x10000, scoped, tag = 'input window, operand 2, single buffered']
    #allocation8 [shape = 'u8[65536]{0}', space=vmem, size = 0x10000, scoped, tag = 'input window, operand 3, single buffered']
    #allocation9 [shape = 's32[1]{0}', space=sflag, size = 0x4, scoped, tag = 'scoped memory for tpu_custom_call.1']
    #allocation10 [shape = 'u8[65536]{0}', space=vmem, size = 0x10000, scoped, tag = 'input window, operand 5, single buffered']
    #allocation11 [shape = 'u8[65536]{0}', space=vmem, size = 0x10000, scoped, tag = 'input window, operand 6, single buffered']
    #allocation12 [shape = 's32[1]{0}', space=sflag, size = 0x4, scoped, tag = 'scoped memory for tpu_custom_call.1']
    #allocation13 [shape = 'u8[65536]{0}', space=vmem, size = 0x10000, scoped, tag = 'input window, operand 8, single buffered']
    #allocation14 [shape = 'u8[65536]{0}', space=vmem, size = 0x10000, scoped, tag = 'input window, operand 9, single buffered']
    #allocation15 [shape = 's32[1]{0}', space=sflag, size = 0x4, scoped, tag = 'scoped memory for tpu_custom_call.1']
    #allocation16 [shape = 'u8[65536]{0}', space=vmem, size = 0x10000, scoped, tag = 'output window, operand 0, single buffered']
    %16 = vsyncpa [#allocation3], 0
    %17 = vsyncpa [#allocation6], 0
    %18 = vsyncpa [#allocation9], 0
    %19 = vsyncpa [#allocation12], 0
    %20 = vsyncpa [#allocation15], 0
    %21 = vsyncpa [#allocation4], 0
    // Predicated region
    $region2: #{tpu_custom_call.1} parent=1 // pred_check
      _
    $region3: #{tpu_custom_call.1} parent=1 // pred_check_branch
      %23 = sbr.rel (0) target = $region5
    $region4: #{tpu_custom_call.1} parent=1 // pred_region
      %s25 = ssub.s32 2048, 2048
      %26 = vsyncadd [#allocation3], %s25
      %s27 = sshll.u32 [#allocation2], 4
      %s28 = int_to_ptr.vmem [resolvable:$true] %s27
      %33 = dma.hbm_to_vmem [thread:$0]  %s0, 2048, %s28, [#allocation3], 128, 128, 8
    $region5: #{tpu_custom_call.1} parent=1 // pred_fallthru
      _
    // Predicated region
    $region6: #{tpu_custom_call.1} parent=1 // pred_check
      _
    $region7: #{tpu_custom_call.1} parent=1 // pred_check_branch
      %35 = sbr.rel (0) target = $region9
    $region8: #{tpu_custom_call.1} parent=1 // pred_region
      %s37 = ssub.s32 2048, 2048
      %38 = vsyncadd [#allocation6], %s37
      %s39 = sshll.u32 [#allocation5], 4
      %s40 = int_to_ptr.vmem [resolvable:$true] %s39
      %45 = dma.hbm_to_vmem [thread:$0]  %s1, 2048, %s40, [#allocation6], 128, 128, 8
    $region9: #{tpu_custom_call.1} parent=1 // pred_fallthru
      _
    // Predicated region
    $region10: #{tpu_custom_call.1} parent=1 // pred_check
      _
    $region11: #{tpu_custom_call.1} parent=1 // pred_check_branch
      %47 = sbr.rel (0) target = $region13
    $region12: #{tpu_custom_call.1} parent=1 // pred_region
      %s49 = ssub.s32 2048, 2048
      %50 = vsyncadd [#allocation6], %s49
      %s51 = sshll.u32 [#allocation7], 4
      %s52 = int_to_ptr.vmem [resolvable:$true] %s51
      %57 = dma.hbm_to_vmem [thread:$0]  %s2, 2048, %s52, [#allocation6], 128, 128, 8
    $region13: #{tpu_custom_call.1} parent=1 // pred_fallthru
      _
    // Predicated region
    $region14: #{tpu_custom_call.1} parent=1 // pred_check
      _
    $region15: #{tpu_custom_call.1} parent=1 // pred_check_branch
      %59 = sbr.rel (0) target = $region17
    $region16: #{tpu_custom_call.1} parent=1 // pred_region
      %s61 = ssub.s32 2048, 2048
      %62 = vsyncadd [#allocation9], %s61
      %s63 = sshll.u32 [#allocation8], 4
      %s64 = int_to_ptr.vmem [resolvable:$true] %s63
      %69 = dma.hbm_to_vmem [thread:$0]  %s3, 2048, %s64, [#allocation9], 128, 128, 8
    $region17: #{tpu_custom_call.1} parent=1 // pred_fallthru
      _
    // Predicated region
    $region18: #{tpu_custom_call.1} parent=1 // pred_check
      _
    $region19: #{tpu_custom_call.1} parent=1 // pred_check_branch
      %71 = sbr.rel (0) target = $region21
    $region20: #{tpu_custom_call.1} parent=1 // pred_region
      _
    $region21: #{tpu_custom_call.1} parent=1 // pred_fallthru
      _
    // Predicated region
    $region22: #{tpu_custom_call.1} parent=1 // pred_check
      _
    $region23: #{tpu_custom_call.1} parent=1 // pred_check_branch
      %73 = sbr.rel (0) target = $region25
    $region24: #{tpu_custom_call.1} parent=1 // pred_region
      %s75 = ssub.s32 2048, 2048
      %76 = vsyncadd [#allocation9], %s75
      %s77 = sshll.u32 [#allocation10], 4
      %s78 = int_to_ptr.vmem [resolvable:$true] %s77
      %83 = dma.hbm_to_vmem [thread:$0]  %s5, 2048, %s78, [#allocation9], 128, 128, 8
    $region25: #{tpu_custom_call.1} parent=1 // pred_fallthru
      _
    // Predicated region
    $region26: #{tpu_custom_call.1} parent=1 // pred_check
      _
    $region27: #{tpu_custom_call.1} parent=1 // pred_check_branch
      %85 = sbr.rel (0) target = $region29
    $region28: #{tpu_custom_call.1} parent=1 // pred_region
      %s87 = ssub.s32 2048, 2048
      %88 = vsyncadd [#allocation12], %s87
      %s89 = sshll.u32 [#allocation11], 4
      %s90 = int_to_ptr.vmem [resolvable:$true] %s89
      %95 = dma.hbm_to_vmem [thread:$0]  %s6, 2048, %s90, [#allocation12], 128, 128, 8
    $region29: #{tpu_custom_call.1} parent=1 // pred_fallthru
      _
    // Predicated region
    $region30: #{tpu_custom_call.1} parent=1 // pred_check
      _
    $region31: #{tpu_custom_call.1} parent=1 // pred_check_branch
      %97 = sbr.rel (0) target = $region33
    $region32: #{tpu_custom_call.1} parent=1 // pred_region
      _
    $region33: #{tpu_custom_call.1} parent=1 // pred_fallthru
      _
    // Predicated region
    $region34: #{tpu_custom_call.1} parent=1 // pred_check
      _
    $region35: #{tpu_custom_call.1} parent=1 // pred_check_branch
      %99 = sbr.rel (0) target = $region37
    $region36: #{tpu_custom_call.1} parent=1 // pred_region
      %s101 = ssub.s32 2048, 2048
      %102 = vsyncadd [#allocation12], %s101
      %s103 = sshll.u32 [#allocation13], 4
      %s104 = int_to_ptr.vmem [resolvable:$true] %s103
      %109 = dma.hbm_to_vmem [thread:$0]  %s8, 2048, %s104, [#allocation12], 128, 128, 8
    $region37: #{tpu_custom_call.1} parent=1 // pred_fallthru
      _
    // Predicated region
    $region38: #{tpu_custom_call.1} parent=1 // pred_check
      _
    $region39: #{tpu_custom_call.1} parent=1 // pred_check_branch
      %111 = sbr.rel (0) target = $region41
    $region40: #{tpu_custom_call.1} parent=1 // pred_region
      %s113 = ssub.s32 2048, 2048
      %114 = vsyncadd [#allocation15], %s113
      %s115 = sshll.u32 [#allocation14], 4
      %s116 = int_to_ptr.vmem [resolvable:$true] %s115
      %121 = dma.hbm_to_vmem [thread:$0]  %s9, 2048, %s116, [#allocation15], 128, 128, 8
    $region41: #{tpu_custom_call.1} parent=1 // pred_fallthru
      _
    // Predicated region
    $region42: #{tpu_custom_call.1} parent=1 // pred_check
      _
    $region43: #{tpu_custom_call.1} parent=1 // pred_check_branch
      %123 = sbr.rel (0) target = $region45
    $region44: #{tpu_custom_call.1} parent=1 // pred_region
      _
    $region45: #{tpu_custom_call.1} parent=1 // pred_fallthru
      _
    // Predicated region
    $region46: #{tpu_custom_call.1} parent=1 // pred_check
      _
    $region47: #{tpu_custom_call.1} parent=1 // pred_check_branch
      %125 = sbr.rel (0) target = $region49
    $region48: #{tpu_custom_call.1} parent=1 // pred_region
      %126 = dma.done [#allocation3], 2048
    $region49: #{tpu_custom_call.1} parent=1 // pred_fallthru
      _
    // Predicated region
    $region50: #{tpu_custom_call.1} parent=1 // pred_check
      _
    $region51: #{tpu_custom_call.1} parent=1 // pred_check_branch
      %128 = sbr.rel (0) target = $region53
    $region52: #{tpu_custom_call.1} parent=1 // pred_region
      %129 = dma.done [#allocation6], 2048
    $region53: #{tpu_custom_call.1} parent=1 // pred_fallthru
      _
    // Predicated region
    $region54: #{tpu_custom_call.1} parent=1 // pred_check
      _
    $region55: #{tpu_custom_call.1} parent=1 // pred_check_branch
      %131 = sbr.rel (0) target = $region57
    $region56: #{tpu_custom_call.1} parent=1 // pred_region
      %132 = dma.done [#allocation6], 2048
    $region57: #{tpu_custom_call.1} parent=1 // pred_fallthru
      _
    // Predicated region
    $region58: #{tpu_custom_call.1} parent=1 // pred_check
      _
    $region59: #{tpu_custom_call.1} parent=1 // pred_check_branch
      %134 = sbr.rel (0) target = $region61
    $region60: #{tpu_custom_call.1} parent=1 // pred_region
      %135 = dma.done [#allocation9], 2048
    $region61: #{tpu_custom_call.1} parent=1 // pred_fallthru
      _
    // Predicated region
    $region62: #{tpu_custom_call.1} parent=1 // pred_check
      _
    $region63: #{tpu_custom_call.1} parent=1 // pred_check_branch
      %137 = sbr.rel (0) target = $region65
    $region64: #{tpu_custom_call.1} parent=1 // pred_region
      %138 = dma.done [#allocation9], 2048
    $region65: #{tpu_custom_call.1} parent=1 // pred_fallthru
      _
    // Predicated region
    $region66: #{tpu_custom_call.1} parent=1 // pred_check
      _
    $region67: #{tpu_custom_call.1} parent=1 // pred_check_branch
      %140 = sbr.rel (0) target = $region69
    $region68: #{tpu_custom_call.1} parent=1 // pred_region
      %141 = dma.done [#allocation12], 2048
    $region69: #{tpu_custom_call.1} parent=1 // pred_fallthru
      _
    // Predicated region
    $region70: #{tpu_custom_call.1} parent=1 // pred_check
      _
    $region71: #{tpu_custom_call.1} parent=1 // pred_check_branch
      %143 = sbr.rel (0) target = $region73
    $region72: #{tpu_custom_call.1} parent=1 // pred_region
      %144 = dma.done [#allocation12], 2048
    $region73: #{tpu_custom_call.1} parent=1 // pred_fallthru
      _
    // Predicated region
    $region74: #{tpu_custom_call.1} parent=1 // pred_check
      _
    $region75: #{tpu_custom_call.1} parent=1 // pred_check_branch
      %146 = sbr.rel (0) target = $region77
    $region76: #{tpu_custom_call.1} parent=1 // pred_region
      %147 = dma.done [#allocation15], 2048
    $region77: #{tpu_custom_call.1} parent=1 // pred_fallthru
      _
    %v148 = vld [vmem:[#allocation2] sm:$0xff]
    %v149 = vld [vmem:[#allocation2 + $0x8] sm:$0xff]
    %v150 = vld [vmem:[#allocation2 + $0x10] sm:$0xff]
    %v151 = vld [vmem:[#allocation2 + $0x18] sm:$0xff]
    %v152 = vld [vmem:[#allocation2 + $0x20] sm:$0xff]
    %v153 = vld [vmem:[#allocation2 + $0x28] sm:$0xff]
    %v154 = vld [vmem:[#allocation2 + $0x30] sm:$0xff]
    %v155 = vld [vmem:[#allocation2 + $0x38] sm:$0xff]
    %v156 = vld [vmem:[#allocation2 + $0x40] sm:$0xff]
    %v157 = vld [vmem:[#allocation2 + $0x48] sm:$0xff]
    %v158 = vld [vmem:[#allocation2 + $0x50] sm:$0xff]
    %v159 = vld [vmem:[#allocation2 + $0x58] sm:$0xff]
    %v160 = vld [vmem:[#allocation2 + $0x60] sm:$0xff]
    %v161 = vld [vmem:[#allocation2 + $0x68] sm:$0xff]
    %v162 = vld [vmem:[#allocation2 + $0x70] sm:$0xff]
    %v163 = vld [vmem:[#allocation2 + $0x78] sm:$0xff]
    %v164 = vld [vmem:[#allocation5] sm:$0xff]
    %v165 = vld [vmem:[#allocation5 + $0x8] sm:$0xff]
    %v166 = vld [vmem:[#allocation5 + $0x10] sm:$0xff]
    %v167 = vld [vmem:[#allocation5 + $0x18] sm:$0xff]
    %v168 = vld [vmem:[#allocation5 + $0x20] sm:$0xff]
    %v169 = vld [vmem:[#allocation5 + $0x28] sm:$0xff]
    %v170 = vld [vmem:[#allocation5 + $0x30] sm:$0xff]
    %v171 = vld [vmem:[#allocation5 + $0x38] sm:$0xff]
    %v172 = vld [vmem:[#allocation5 + $0x40] sm:$0xff]
    %v173 = vld [vmem:[#allocation5 + $0x48] sm:$0xff]
    %v174 = vld [vmem:[#allocation5 + $0x50] sm:$0xff]
    %v175 = vld [vmem:[#allocation5 + $0x58] sm:$0xff]
    %v176 = vld [vmem:[#allocation5 + $0x60] sm:$0xff]
    %v177 = vld [vmem:[#allocation5 + $0x68] sm:$0xff]
    %v178 = vld [vmem:[#allocation5 + $0x70] sm:$0xff]
    %v179 = vld [vmem:[#allocation5 + $0x78] sm:$0xff]
    %180 = vmatprep.subr.mxu0 0.0
    %181 = vmatpush1.msra.mxu0 %v164
    %182 = vmatprep.subr.mxu0 0.0
    %183 = vmatpush1.msra.mxu0 %v165
    %184 = vmatprep.subr.mxu0 0.0
    %185 = vmatpush1.msra.mxu0 %v166
    %186 = vmatprep.subr.mxu0 0.0
    %187 = vmatpush1.msra.mxu0 %v167
    %188 = vmatprep.subr.mxu0 0.0
    %189 = vmatpush1.msra.mxu0 %v168
    %190 = vmatprep.subr.mxu0 0.0
    %191 = vmatpush1.msra.mxu0 %v169
    %192 = vmatprep.subr.mxu0 0.0
    %193 = vmatpush1.msra.mxu0 %v170
    %194 = vmatprep.subr.mxu0 0.0
    %195 = vmatpush1.msra.mxu0 %v171
    %196 = vmatprep.subr.mxu0 0.0
    %197 = vmatpush1.msra.mxu0 %v172
    %198 = vmatprep.subr.mxu0 0.0
    %199 = vmatpush1.msra.mxu0 %v173
    %200 = vmatprep.subr.mxu0 0.0
    %201 = vmatpush1.msra.mxu0 %v174
    %202 = vmatprep.subr.mxu0 0.0
    %203 = vmatpush1.msra.mxu0 %v175
    %204 = vmatprep.subr.mxu0 0.0
    %205 = vmatpush1.msra.mxu0 %v176
    %206 = vmatprep.subr.mxu0 0.0
    %207 = vmatpush1.msra.mxu0 %v177
    %208 = vmatprep.subr.mxu0 0.0
    %209 = vmatpush1.msra.mxu0 %v178
    %210 = vmatprep.subr.mxu0 0.0
    %211 = vmatpush1.msra.mxu0 %v179
    %212 = vmatprep.subr.mxu0 0.0
    %213 = vmatpush1.msra.mxu0 0.0
    %214 = vmatprep.subr.mxu0 0.0
    %215 = vmatpush1.msra.mxu0 0.0
    %216 = vmatprep.subr.mxu0 0.0
    %217 = vmatpush1.msra.mxu0 0.0
    %218 = vmatprep.subr.mxu0 0.0
    %219 = vmatpush1.msra.mxu0 0.0
    %220 = vmatprep.subr.mxu0 0.0
    %221 = vmatpush1.msra.mxu0 0.0
    %222 = vmatprep.subr.mxu0 0.0
    %223 = vmatpush1.msra.mxu0 0.0
    %224 = vmatprep.subr.mxu0 0.0
    %225 = vmatpush1.msra.mxu0 0.0
    %226 = vmatprep.subr.mxu0 0.0
    %227 = vmatpush1.msra.mxu0 0.0
    %228 = vmatprep.subr.mxu0 0.0
    %229 = vmatpush1.msra.mxu0 0.0
    %230 = vmatprep.subr.mxu0 0.0
    %231 = vmatpush1.msra.mxu0 0.0
    %232 = vmatprep.subr.mxu0 0.0
    %233 = vmatpush1.msra.mxu0 0.0
    %234 = vmatprep.subr.mxu0 0.0
    %235 = vmatpush1.msra.mxu0 0.0
    %236 = vmatprep.subr.mxu0 0.0
    %237 = vmatpush1.msra.mxu0 0.0
    %238 = vmatprep.subr.mxu0 0.0
    %239 = vmatpush1.msra.mxu0 0.0
    %240 = vmatprep.subr.mxu0 0.0
    %241 = vmatpush1.msra.mxu0 0.0
    %242 = vmatprep.subr.mxu0 0.0
    %243 = vmatpush1.msra.mxu0 0.0
    %244 = vmatprep.mubr.f32.mxu0 0.0
    %245 = vmatmul.mubr.f32.gmra.mrb[0].mxu0 %v148
    %v246 = vpop.f32.mrb[0].mxu0
    %v247 = vadd.f32 0.0, %v246
    %v248 = vpop.f32.mrb[0].mxu0
    %249 = vmatprep.mubr.f32.mxu0 0.0
    %250 = vmatmul.mubr.f32.gmra.mrb[0].mxu0 %v149
    %v251 = vpop.f32.mrb[0].mxu0
    %v252 = vadd.f32 0.0, %v251
    %v253 = vpop.f32.mrb[0].mxu0
    %254 = vmatprep.mubr.f32.mxu0 0.0
    %255 = vmatmul.mubr.f32.gmra.mrb[0].mxu0 %v150
    %v256 = vpop.f32.mrb[0].mxu0
    %v257 = vadd.f32 0.0, %v256
    %v258 = vpop.f32.mrb[0].mxu0
    %259 = vmatprep.mubr.f32.mxu0 0.0
    %260 = vmatmul.mubr.f32.gmra.mrb[0].mxu0 %v151
    %v261 = vpop.f32.mrb[0].mxu0
    %v262 = vadd.f32 0.0, %v261
    %v263 = vpop.f32.mrb[0].mxu0
    %264 = vmatprep.mubr.f32.mxu0 0.0
    %265 = vmatmul.mubr.f32.gmra.mrb[0].mxu0 %v152
    %v266 = vpop.f32.mrb[0].mxu0
    %v267 = vadd.f32 0.0, %v266
    %v268 = vpop.f32.mrb[0].mxu0
    %269 = vmatprep.mubr.f32.mxu0 0.0
    %270 = vmatmul.mubr.f32.gmra.mrb[0].mxu0 %v153
    %v271 = vpop.f32.mrb[0].mxu0
    %v272 = vadd.f32 0.0, %v271
    %v273 = vpop.f32.mrb[0].mxu0
    %274 = vmatprep.mubr.f32.mxu0 0.0
    %275 = vmatmul.mubr.f32.gmra.mrb[0].mxu0 %v154
    %v276 = vpop.f32.mrb[0].mxu0
    %v277 = vadd.f32 0.0, %v276
    %v278 = vpop.f32.mrb[0].mxu0
    %279 = vmatprep.mubr.f32.mxu0 0.0
    %280 = vmatmul.mubr.f32.gmra.mrb[0].mxu0 %v155
    %v281 = vpop.f32.mrb[0].mxu0
    %v282 = vadd.f32 0.0, %v281
    %v283 = vpop.f32.mrb[0].mxu0
    %284 = vmatprep.mubr.f32.mxu0 0.0
    %285 = vmatmul.mubr.f32.gmra.mrb[0].mxu0 %v156
    %v286 = vpop.f32.mrb[0].mxu0
    %v287 = vadd.f32 0.0, %v286
    %v288 = vpop.f32.mrb[0].mxu0
    %289 = vmatprep.mubr.f32.mxu0 0.0
    %290 = vmatmul.mubr.f32.gmra.mrb[0].mxu0 %v157
    %v291 = vpop.f32.mrb[0].mxu0
    %v292 = vadd.f32 0.0, %v291
    %v293 = vpop.f32.mrb[0].mxu0
    %294 = vmatprep.mubr.f32.mxu0 0.0
    %295 = vmatmul.mubr.f32.gmra.mrb[0].mxu0 %v158
    %v296 = vpop.f32.mrb[0].mxu0
    %v297 = vadd.f32 0.0, %v296
    %v298 = vpop.f32.mrb[0].mxu0
    %299 = vmatprep.mubr.f32.mxu0 0.0
    %300 = vmatmul.mubr.f32.gmra.mrb[0].mxu0 %v159
    %v301 = vpop.f32.mrb[0].mxu0
    %v302 = vadd.f32 0.0, %v301
    %v303 = vpop.f32.mrb[0].mxu0
    %304 = vmatprep.mubr.f32.mxu0 0.0
    %305 = vmatmul.mubr.f32.gmra.mrb[0].mxu0 %v160
    %v306 = vpop.f32.mrb[0].mxu0
    %v307 = vadd.f32 0.0, %v306
    %v308 = vpop.f32.mrb[0].mxu0
    %309 = vmatprep.mubr.f32.mxu0 0.0
    %310 = vmatmul.mubr.f32.gmra.mrb[0].mxu0 %v161
    %v311 = vpop.f32.mrb[0].mxu0
    %v312 = vadd.f32 0.0, %v311
    %v313 = vpop.f32.mrb[0].mxu0
    %314 = vmatprep.mubr.f32.mxu0 0.0
    %315 = vmatmul.mubr.f32.gmra.mrb[0].mxu0 %v162
    %v316 = vpop.f32.mrb[0].mxu0
    %v317 = vadd.f32 0.0, %v316
    %v318 = vpop.f32.mrb[0].mxu0
    %319 = vmatprep.mubr.f32.mxu0 0.0
    %320 = vmatmul.mubr.f32.gmra.mrb[0].mxu0 %v163
    %v321 = vpop.f32.mrb[0].mxu0
    %v322 = vadd.f32 0.0, %v321
    %v323 = vpop.f32.mrb[0].mxu0
    %324 = vdwg.mxu0
    %v325 = vld [vmem:[#allocation7] sm:$0xff]
    %v326 = vld [vmem:[#allocation7 + $0x8] sm:$0xff]
    %v327 = vld [vmem:[#allocation7 + $0x10] sm:$0xff]
    %v328 = vld [vmem:[#allocation7 + $0x18] sm:$0xff]
    %v329 = vld [vmem:[#allocation7 + $0x20] sm:$0xff]
    %v330 = vld [vmem:[#allocation7 + $0x28] sm:$0xff]
    %v331 = vld [vmem:[#allocation7 + $0x30] sm:$0xff]
    %v332 = vld [vmem:[#allocation7 + $0x38] sm:$0xff]
    %v333 = vld [vmem:[#allocation7 + $0x40] sm:$0xff]
    %v334 = vld [vmem:[#allocation7 + $0x48] sm:$0xff]
    %v335 = vld [vmem:[#allocation7 + $0x50] sm:$0xff]
    %v336 = vld [vmem:[#allocation7 + $0x58] sm:$0xff]
    %v337 = vld [vmem:[#allocation7 + $0x60] sm:$0xff]
    %v338 = vld [vmem:[#allocation7 + $0x68] sm:$0xff]
    %v339 = vld [vmem:[#allocation7 + $0x70] sm:$0xff]
    %v340 = vld [vmem:[#allocation7 + $0x78] sm:$0xff]
    %v341 = vld [vmem:[#allocation8] sm:$0xff]
    %v342 = vld [vmem:[#allocation8 + $0x8] sm:$0xff]
    %v343 = vld [vmem:[#allocation8 + $0x10] sm:$0xff]
    %v344 = vld [vmem:[#allocation8 + $0x18] sm:$0xff]
    %v345 = vld [vmem:[#allocation8 + $0x20] sm:$0xff]
    %v346 = vld [vmem:[#allocation8 + $0x28] sm:$0xff]
    %v347 = vld [vmem:[#allocation8 + $0x30] sm:$0xff]
    %v348 = vld [vmem:[#allocation8 + $0x38] sm:$0xff]
    %v349 = vld [vmem:[#allocation8 + $0x40] sm:$0xff]
    %v350 = vld [vmem:[#allocation8 + $0x48] sm:$0xff]
    %v351 = vld [vmem:[#allocation8 + $0x50] sm:$0xff]
    %v352 = vld [vmem:[#allocation8 + $0x58] sm:$0xff]
    %v353 = vld [vmem:[#allocation8 + $0x60] sm:$0xff]
    %v354 = vld [vmem:[#allocation8 + $0x68] sm:$0xff]
    %v355 = vld [vmem:[#allocation8 + $0x70] sm:$0xff]
    %v356 = vld [vmem:[#allocation8 + $0x78] sm:$0xff]
    %357 = vmatprep.subr.mxu0 0.0
    %358 = vmatpush1.msra.mxu0 %v341
    %359 = vmatprep.subr.mxu0 0.0
    %360 = vmatpush1.msra.mxu0 %v342
    %361 = vmatprep.subr.mxu0 0.0
    %362 = vmatpush1.msra.mxu0 %v343
    %363 = vmatprep.subr.mxu0 0.0
    %364 = vmatpush1.msra.mxu0 %v344
    %365 = vmatprep.subr.mxu0 0.0
    %366 = vmatpush1.msra.mxu0 %v345
    %367 = vmatprep.subr.mxu0 0.0
    %368 = vmatpush1.msra.mxu0 %v346
    %369 = vmatprep.subr.mxu0 0.0
    %370 = vmatpush1.msra.mxu0 %v347
    %371 = vmatprep.subr.mxu0 0.0
    %372 = vmatpush1.msra.mxu0 %v348
    %373 = vmatprep.subr.mxu0 0.0
    %374 = vmatpush1.msra.mxu0 %v349
    %375 = vmatprep.subr.mxu0 0.0
    %376 = vmatpush1.msra.mxu0 %v350
    %377 = vmatprep.subr.mxu0 0.0
    %378 = vmatpush1.msra.mxu0 %v351
    %379 = vmatprep.subr.mxu0 0.0
    %380 = vmatpush1.msra.mxu0 %v352
    %381 = vmatprep.subr.mxu0 0.0
    %382 = vmatpush1.msra.mxu0 %v353
    %383 = vmatprep.subr.mxu0 0.0
    %384 = vmatpush1.msra.mxu0 %v354
    %385 = vmatprep.subr.mxu0 0.0
    %386 = vmatpush1.msra.mxu0 %v355
    %387 = vmatprep.subr.mxu0 0.0
    %388 = vmatpush1.msra.mxu0 %v356
    %389 = vmatprep.subr.mxu0 0.0
    %390 = vmatpush1.msra.mxu0 0.0
    %391 = vmatprep.subr.mxu0 0.0
    %392 = vmatpush1.msra.mxu0 0.0
    %393 = vmatprep.subr.mxu0 0.0
    %394 = vmatpush1.msra.mxu0 0.0
    %395 = vmatprep.subr.mxu0 0.0
    %396 = vmatpush1.msra.mxu0 0.0
    %397 = vmatprep.subr.mxu0 0.0
    %398 = vmatpush1.msra.mxu0 0.0
    %399 = vmatprep.subr.mxu0 0.0
    %400 = vmatpush1.msra.mxu0 0.0
    %401 = vmatprep.subr.mxu0 0.0
    %402 = vmatpush1.msra.mxu0 0.0
    %403 = vmatprep.subr.mxu0 0.0
    %404 = vmatpush1.msra.mxu0 0.0
    %405 = vmatprep.subr.mxu0 0.0
    %406 = vmatpush1.msra.mxu0 0.0
    %407 = vmatprep.subr.mxu0 0.0
    %408 = vmatpush1.msra.mxu0 0.0
    %409 = vmatprep.subr.mxu0 0.0
    %410 = vmatpush1.msra.mxu0 0.0
    %411 = vmatprep.subr.mxu0 0.0
    %412 = vmatpush1.msra.mxu0 0.0
    %413 = vmatprep.subr.mxu0 0.0
    %414 = vmatpush1.msra.mxu0 0.0
    %415 = vmatprep.subr.mxu0 0.0
    %416 = vmatpush1.msra.mxu0 0.0
    %417 = vmatprep.subr.mxu0 0.0
    %418 = vmatpush1.msra.mxu0 0.0
    %419 = vmatprep.subr.mxu0 0.0
    %420 = vmatpush1.msra.mxu0 0.0
    %421 = vmatprep.mubr.f32.mxu0 0.0
    %422 = vmatmul.mubr.f32.gmra.mrb[0].mxu0 %v164
    %v423 = vpop.f32.mrb[0].mxu0
    %v424 = vadd.f32 0.0, %v423
    %v425 = vpop.f32.mrb[0].mxu0
    %426 = vmatprep.mubr.f32.mxu0 0.0
    %427 = vmatmul.mubr.f32.gmra.mrb[0].mxu0 %v165
    %v428 = vpop.f32.mrb[0].mxu0
    %v429 = vadd.f32 0.0, %v428
    %v430 = vpop.f32.mrb[0].mxu0
    %431 = vmatprep.mubr.f32.mxu0 0.0
    %432 = vmatmul.mubr.f32.gmra.mrb[0].mxu0 %v166
    %v433 = vpop.f32.mrb[0].mxu0
    %v434 = vadd.f32 0.0, %v433
    %v435 = vpop.f32.mrb[0].mxu0
    %436 = vmatprep.mubr.f32.mxu0 0.0
    %437 = vmatmul.mubr.f32.gmra.mrb[0].mxu0 %v167
    %v438 = vpop.f32.mrb[0].mxu0
    %v439 = vadd.f32 0.0, %v438
    %v440 = vpop.f32.mrb[0].mxu0
    %441 = vmatprep.mubr.f32.mxu0 0.0
    %442 = vmatmul.mubr.f32.gmra.mrb[0].mxu0 %v168
    %v443 = vpop.f32.mrb[0].mxu0
    %v444 = vadd.f32 0.0, %v443
    %v445 = vpop.f32.mrb[0].mxu0
    %446 = vmatprep.mubr.f32.mxu0 0.0
    %447 = vmatmul.mubr.f32.gmra.mrb[0].mxu0 %v169
    %v448 = vpop.f32.mrb[0].mxu0
    %v449 = vadd.f32 0.0, %v448
    %v450 = vpop.f32.mrb[0].mxu0
    %451 = vmatprep.mubr.f32.mxu0 0.0
    %452 = vmatmul.mubr.f32.gmra.mrb[0].mxu0 %v170
    %v453 = vpop.f32.mrb[0].mxu0
    %v454 = vadd.f32 0.0, %v453
    %v455 = vpop.f32.mrb[0].mxu0
    %456 = vmatprep.mubr.f32.mxu0 0.0
    %457 = vmatmul.mubr.f32.gmra.mrb[0].mxu0 %v171
    %v458 = vpop.f32.mrb[0].mxu0
    %v459 = vadd.f32 0.0, %v458
    %v460 = vpop.f32.mrb[0].mxu0
    %461 = vmatprep.mubr.f32.mxu0 0.0
    %462 = vmatmul.mubr.f32.gmra.mrb[0].mxu0 %v172
    %v463 = vpop.f32.mrb[0].mxu0
    %v464 = vadd.f32 0.0, %v463
    %v465 = vpop.f32.mrb[0].mxu0
    %466 = vmatprep.mubr.f32.mxu0 0.0
    %467 = vmatmul.mubr.f32.gmra.mrb[0].mxu0 %v173
    %v468 = vpop.f32.mrb[0].mxu0
    %v469 = vadd.f32 0.0, %v468
    %v470 = vpop.f32.mrb[0].mxu0
    %471 = vmatprep.mubr.f32.mxu0 0.0
    %472 = vmatmul.mubr.f32.gmra.mrb[0].mxu0 %v174
    %v473 = vpop.f32.mrb[0].mxu0
    %v474 = vadd.f32 0.0, %v473
    %v475 = vpop.f32.mrb[0].mxu0
    %476 = vmatprep.mubr.f32.mxu0 0.0
    %477 = vmatmul.mubr.f32.gmra.mrb[0].mxu0 %v175
    %v478 = vpop.f32.mrb[0].mxu0
    %v479 = vadd.f32 0.0, %v478
    %v480 = vpop.f32.mrb[0].mxu0
    %481 = vmatprep.mubr.f32.mxu0 0.0
    %482 = vmatmul.mubr.f32.gmra.mrb[0].mxu0 %v176
    %v483 = vpop.f32.mrb[0].mxu0
    %v484 = vadd.f32 0.0, %v483
    %v485 = vpop.f32.mrb[0].mxu0
    %486 = vmatprep.mubr.f32.mxu0 0.0
    %487 = vmatmul.mubr.f32.gmra.mrb[0].mxu0 %v177
    %v488 = vpop.f32.mrb[0].mxu0
    %v489 = vadd.f32 0.0, %v488
    %v490 = vpop.f32.mrb[0].mxu0
    %491 = vmatprep.mubr.f32.mxu0 0.0
    %492 = vmatmul.mubr.f32.gmra.mrb[0].mxu0 %v178
    %v493 = vpop.f32.mrb[0].mxu0
    %v494 = vadd.f32 0.0, %v493
    %v495 = vpop.f32.mrb[0].mxu0
    %496 = vmatprep.mubr.f32.mxu0 0.0
    %497 = vmatmul.mubr.f32.gmra.mrb[0].mxu0 %v179
    %v498 = vpop.f32.mrb[0].mxu0
    %v499 = vadd.f32 0.0, %v498
    %v500 = vpop.f32.mrb[0].mxu0
    %501 = vdwg.mxu0
    %502 = vmatprep.subr.mxu0 0.0
    %503 = vmatpush1.msra.mxu0 %v325
    %504 = vmatprep.subr.mxu0 0.0
    %505 = vmatpush1.msra.mxu0 %v326
    %506 = vmatprep.subr.mxu0 0.0
    %507 = vmatpush1.msra.mxu0 %v327
    %508 = vmatprep.subr.mxu0 0.0
    %509 = vmatpush1.msra.mxu0 %v328
    %510 = vmatprep.subr.mxu0 0.0
    %511 = vmatpush1.msra.mxu0 %v329
    %512 = vmatprep.subr.mxu0 0.0
    %513 = vmatpush1.msra.mxu0 %v330
    %514 = vmatprep.subr.mxu0 0.0
    %515 = vmatpush1.msra.mxu0 %v331
    %516 = vmatprep.subr.mxu0 0.0
    %517 = vmatpush1.msra.mxu0 %v332
    %518 = vmatprep.subr.mxu0 0.0
    %519 = vmatpush1.msra.mxu0 %v333
    %520 = vmatprep.subr.mxu0 0.0
    %521 = vmatpush1.msra.mxu0 %v334
    %522 = vmatprep.subr.mxu0 0.0
    %523 = vmatpush1.msra.mxu0 %v335
    %524 = vmatprep.subr.mxu0 0.0
    %525 = vmatpush1.msra.mxu0 %v336
    %526 = vmatprep.subr.mxu0 0.0
    %527 = vmatpush1.msra.mxu0 %v337
    %528 = vmatprep.subr.mxu0 0.0
    %529 = vmatpush1.msra.mxu0 %v338
    %530 = vmatprep.subr.mxu0 0.0
    %531 = vmatpush1.msra.mxu0 %v339
    %532 = vmatprep.subr.mxu0 0.0
    %533 = vmatpush1.msra.mxu0 %v340
    %534 = vmatprep.subr.mxu0 0.0
    %535 = vmatpush1.msra.mxu0 0.0
    %536 = vmatprep.subr.mxu0 0.0
    %537 = vmatpush1.msra.mxu0 0.0
    %538 = vmatprep.subr.mxu0 0.0
    %539 = vmatpush1.msra.mxu0 0.0
    %540 = vmatprep.subr.mxu0 0.0
    %541 = vmatpush1.msra.mxu0 0.0
    %542 = vmatprep.subr.mxu0 0.0
    %543 = vmatpush1.msra.mxu0 0.0
    %544 = vmatprep.subr.mxu0 0.0
    %545 = vmatpush1.msra.mxu0 0.0
    %546 = vmatprep.subr.mxu0 0.0
    %547 = vmatpush1.msra.mxu0 0.0
    %548 = vmatprep.subr.mxu0 0.0
    %549 = vmatpush1.msra.mxu0 0.0
    %550 = vmatprep.subr.mxu0 0.0
    %551 = vmatpush1.msra.mxu0 0.0
    %552 = vmatprep.subr.mxu0 0.0
    %553 = vmatpush1.msra.mxu0 0.0
    %554 = vmatprep.subr.mxu0 0.0
    %555 = vmatpush1.msra.mxu0 0.0
    %556 = vmatprep.subr.mxu0 0.0
    %557 = vmatpush1.msra.mxu0 0.0
    %558 = vmatprep.subr.mxu0 0.0
    %559 = vmatpush1.msra.mxu0 0.0
    %560 = vmatprep.subr.mxu0 0.0
    %561 = vmatpush1.msra.mxu0 0.0
    %562 = vmatprep.subr.mxu0 0.0
    %563 = vmatpush1.msra.mxu0 0.0
    %564 = vmatprep.subr.mxu0 0.0
    %565 = vmatpush1.msra.mxu0 0.0
    %566 = vmatprep.mubr.f32.mxu0 0.0
    %567 = vmatmul.mubr.f32.gmra.mrb[0].mxu0 %v247
    %v568 = vpop.f32.mrb[0].mxu0
    %v569 = vadd.f32 %v424, %v568
    %v570 = vpop.f32.mrb[0].mxu0
    %571 = vmatprep.mubr.f32.mxu0 0.0
    %572 = vmatmul.mubr.f32.gmra.mrb[0].mxu0 %v252
    %v573 = vpop.f32.mrb[0].mxu0
    %v574 = vadd.f32 %v429, %v573
    %v575 = vpop.f32.mrb[0].mxu0
    %576 = vmatprep.mubr.f32.mxu0 0.0
    %577 = vmatmul.mubr.f32.gmra.mrb[0].mxu0 %v257
    %v578 = vpop.f32.mrb[0].mxu0
    %v579 = vadd.f32 %v434, %v578
    %v580 = vpop.f32.mrb[0].mxu0
    %581 = vmatprep.mubr.f32.mxu0 0.0
    %582 = vmatmul.mubr.f32.gmra.mrb[0].mxu0 %v262
    %v583 = vpop.f32.mrb[0].mxu0
    %v584 = vadd.f32 %v439, %v583
    %v585 = vpop.f32.mrb[0].mxu0
    %586 = vmatprep.mubr.f32.mxu0 0.0
    %587 = vmatmul.mubr.f32.gmra.mrb[0].mxu0 %v267
    %v588 = vpop.f32.mrb[0].mxu0
    %v589 = vadd.f32 %v444, %v588
    %v590 = vpop.f32.mrb[0].mxu0
    %591 = vmatprep.mubr.f32.mxu0 0.0
    %592 = vmatmul.mubr.f32.gmra.mrb[0].mxu0 %v272
    %v593 = vpop.f32.mrb[0].mxu0
    %v594 = vadd.f32 %v449, %v593
    %v595 = vpop.f32.mrb[0].mxu0
    %596 = vmatprep.mubr.f32.mxu0 0.0
    %597 = vmatmul.mubr.f32.gmra.mrb[0].mxu0 %v277
    %v598 = vpop.f32.mrb[0].mxu0
    %v599 = vadd.f32 %v454, %v598
    %v600 = vpop.f32.mrb[0].mxu0
    %601 = vmatprep.mubr.f32.mxu0 0.0
    %602 = vmatmul.mubr.f32.gmra.mrb[0].mxu0 %v282
    %v603 = vpop.f32.mrb[0].mxu0
    %v604 = vadd.f32 %v459, %v603
    %v605 = vpop.f32.mrb[0].mxu0
    %606 = vmatprep.mubr.f32.mxu0 0.0
    %607 = vmatmul.mubr.f32.gmra.mrb[0].mxu0 %v287
    %v608 = vpop.f32.mrb[0].mxu0
    %v609 = vadd.f32 %v464, %v608
    %v610 = vpop.f32.mrb[0].mxu0
    %611 = vmatprep.mubr.f32.mxu0 0.0
    %612 = vmatmul.mubr.f32.gmra.mrb[0].mxu0 %v292
    %v613 = vpop.f32.mrb[0].mxu0
    %v614 = vadd.f32 %v469, %v613
    %v615 = vpop.f32.mrb[0].mxu0
    %616 = vmatprep.mubr.f32.mxu0 0.0
    %617 = vmatmul.mubr.f32.gmra.mrb[0].mxu0 %v297
    %v618 = vpop.f32.mrb[0].mxu0
    %v619 = vadd.f32 %v474, %v618
    %v620 = vpop.f32.mrb[0].mxu0
    %621 = vmatprep.mubr.f32.mxu0 0.0
    %622 = vmatmul.mubr.f32.gmra.mrb[0].mxu0 %v302
    %v623 = vpop.f32.mrb[0].mxu0
    %v624 = vadd.f32 %v479, %v623
    %v625 = vpop.f32.mrb[0].mxu0
    %626 = vmatprep.mubr.f32.mxu0 0.0
    %627 = vmatmul.mubr.f32.gmra.mrb[0].mxu0 %v307
    %v628 = vpop.f32.mrb[0].mxu0
    %v629 = vadd.f32 %v484, %v628
    %v630 = vpop.f32.mrb[0].mxu0
    %631 = vmatprep.mubr.f32.mxu0 0.0
    %632 = vmatmul.mubr.f32.gmra.mrb[0].mxu0 %v312
    %v633 = vpop.f32.mrb[0].mxu0
    %v634 = vadd.f32 %v489, %v633
    %v635 = vpop.f32.mrb[0].mxu0
    %636 = vmatprep.mubr.f32.mxu0 0.0
    %637 = vmatmul.mubr.f32.gmra.mrb[0].mxu0 %v317
    %v638 = vpop.f32.mrb[0].mxu0
    %v639 = vadd.f32 %v494, %v638
    %v640 = vpop.f32.mrb[0].mxu0
    %641 = vmatprep.mubr.f32.mxu0 0.0
    %642 = vmatmul.mubr.f32.gmra.mrb[0].mxu0 %v322
    %v643 = vpop.f32.mrb[0].mxu0
    %v644 = vadd.f32 %v499, %v643
    %v645 = vpop.f32.mrb[0].mxu0
    %646 = vdwg.mxu0
    %v647 = vld [vmem:[%s4] sm:$0x1]
    %v649 = vlaneseq
    %v650 = vshrl.u32 %v649, 7
    %v651 = vsub.s32 0, %v650
    %v652 = vrot.slane %v647, %v651
    %v654 = vadd.f32 %v569, %v652
    %v655 = vadd.f32 %v574, %v652
    %v656 = vadd.f32 %v579, %v652
    %v657 = vadd.f32 %v584, %v652
    %v658 = vadd.f32 %v589, %v652
    %v659 = vadd.f32 %v594, %v652
    %v660 = vadd.f32 %v599, %v652
    %v661 = vadd.f32 %v604, %v652
    %v662 = vadd.f32 %v609, %v652
    %v663 = vadd.f32 %v614, %v652
    %v664 = vadd.f32 %v619, %v652
    %v665 = vadd.f32 %v624, %v652
    %v666 = vadd.f32 %v629, %v652
    %v667 = vadd.f32 %v634, %v652
    %v668 = vadd.f32 %v639, %v652
    %v669 = vadd.f32 %v644, %v652
    %v670 = vmax.f32 %v654, 0.0
    %v671 = vmax.f32 %v655, 0.0
    %v672 = vmax.f32 %v656, 0.0
    %v673 = vmax.f32 %v657, 0.0
    %v674 = vmax.f32 %v658, 0.0
    %v675 = vmax.f32 %v659, 0.0
    %v676 = vmax.f32 %v660, 0.0
    %v677 = vmax.f32 %v661, 0.0
    %v678 = vmax.f32 %v662, 0.0
    %v679 = vmax.f32 %v663, 0.0
    %v680 = vmax.f32 %v664, 0.0
    %v681 = vmax.f32 %v665, 0.0
    %v682 = vmax.f32 %v666, 0.0
    %v683 = vmax.f32 %v667, 0.0
    %v684 = vmax.f32 %v668, 0.0
    %v685 = vmax.f32 %v669, 0.0
    %686 = vmatprep.subr.mxu0 0.0
    %687 = vmatpush1.msra.mxu0 %v670
    %688 = vmatprep.subr.mxu0 0.0
    %689 = vmatpush1.msra.mxu0 %v671
    %690 = vmatprep.subr.mxu0 0.0
    %691 = vmatpush1.msra.mxu0 %v672
    %692 = vmatprep.subr.mxu0 0.0
    %693 = vmatpush1.msra.mxu0 %v673
    %694 = vmatprep.subr.mxu0 0.0
    %695 = vmatpush1.msra.mxu0 %v674
    %696 = vmatprep.subr.mxu0 0.0
    %697 = vmatpush1.msra.mxu0 %v675
    %698 = vmatprep.subr.mxu0 0.0
    %699 = vmatpush1.msra.mxu0 %v676
    %700 = vmatprep.subr.mxu0 0.0
    %701 = vmatpush1.msra.mxu0 %v677
    %702 = vmatprep.subr.mxu0 0.0
    %703 = vmatpush1.msra.mxu0 %v678
    %704 = vmatprep.subr.mxu0 0.0
    %705 = vmatpush1.msra.mxu0 %v679
    %706 = vmatprep.subr.mxu0 0.0
    %707 = vmatpush1.msra.mxu0 %v680
    %708 = vmatprep.subr.mxu0 0.0
    %709 = vmatpush1.msra.mxu0 %v681
    %710 = vmatprep.subr.mxu0 0.0
    %711 = vmatpush1.msra.mxu0 %v682
    %712 = vmatprep.subr.mxu0 0.0
    %713 = vmatpush1.msra.mxu0 %v683
    %714 = vmatprep.subr.mxu0 0.0
    %715 = vmatpush1.msra.mxu0 %v684
    %716 = vmatprep.subr.mxu0 0.0
    %717 = vmatpush1.msra.mxu0 %v685
    %718 = vmatprep.subr.mxu0 0.0
    %719 = vmatpush1.msra.mxu0 0.0
    %720 = vmatprep.subr.mxu0 0.0
    %721 = vmatpush1.msra.mxu0 0.0
    %722 = vmatprep.subr.mxu0 0.0
    %723 = vmatpush1.msra.mxu0 0.0
    %724 = vmatprep.subr.mxu0 0.0
    %725 = vmatpush1.msra.mxu0 0.0
    %726 = vmatprep.subr.mxu0 0.0
    %727 = vmatpush1.msra.mxu0 0.0
    %728 = vmatprep.subr.mxu0 0.0
    %729 = vmatpush1.msra.mxu0 0.0
    %730 = vmatprep.subr.mxu0 0.0
    %731 = vmatpush1.msra.mxu0 0.0
    %732 = vmatprep.subr.mxu0 0.0
    %733 = vmatpush1.msra.mxu0 0.0
    %734 = vmatprep.subr.mxu0 0.0
    %735 = vmatpush1.msra.mxu0 0.0
    %736 = vmatprep.subr.mxu0 0.0
    %737 = vmatpush1.msra.mxu0 0.0
    %738 = vmatprep.subr.mxu0 0.0
    %739 = vmatpush1.msra.mxu0 0.0
    %740 = vmatprep.subr.mxu0 0.0
    %741 = vmatpush1.msra.mxu0 0.0
    %742 = vmatprep.subr.mxu0 0.0
    %743 = vmatpush1.msra.mxu0 0.0
    %744 = vmatprep.subr.mxu0 0.0
    %745 = vmatpush1.msra.mxu0 0.0
    %746 = vmatprep.subr.mxu0 0.0
    %747 = vmatpush1.msra.mxu0 0.0
    %748 = vmatprep.subr.mxu0 0.0
    %749 = vmatpush1.msra.mxu0 0.0
    %750 = vmatprep.mubr.f32.mxu0 0.0
    %751 = vmatmul.mubr.f32.gmra.mrb[0].mxu0 %v148
    %v752 = vpop.f32.mrb[0].mxu0
    %v753 = vadd.f32 0.0, %v752
    %v754 = vpop.f32.mrb[0].mxu0
    %755 = vmatprep.mubr.f32.mxu0 0.0
    %756 = vmatmul.mubr.f32.gmra.mrb[0].mxu0 %v149
    %v757 = vpop.f32.mrb[0].mxu0
    %v758 = vadd.f32 0.0, %v757
    %v759 = vpop.f32.mrb[0].mxu0
    %760 = vmatprep.mubr.f32.mxu0 0.0
    %761 = vmatmul.mubr.f32.gmra.mrb[0].mxu0 %v150
    %v762 = vpop.f32.mrb[0].mxu0
    %v763 = vadd.f32 0.0, %v762
    %v764 = vpop.f32.mrb[0].mxu0
    %765 = vmatprep.mubr.f32.mxu0 0.0
    %766 = vmatmul.mubr.f32.gmra.mrb[0].mxu0 %v151
    %v767 = vpop.f32.mrb[0].mxu0
    %v768 = vadd.f32 0.0, %v767
    %v769 = vpop.f32.mrb[0].mxu0
    %770 = vmatprep.mubr.f32.mxu0 0.0
    %771 = vmatmul.mubr.f32.gmra.mrb[0].mxu0 %v152
    %v772 = vpop.f32.mrb[0].mxu0
    %v773 = vadd.f32 0.0, %v772
    %v774 = vpop.f32.mrb[0].mxu0
    %775 = vmatprep.mubr.f32.mxu0 0.0
    %776 = vmatmul.mubr.f32.gmra.mrb[0].mxu0 %v153
    %v777 = vpop.f32.mrb[0].mxu0
    %v778 = vadd.f32 0.0, %v777
    %v779 = vpop.f32.mrb[0].mxu0
    %780 = vmatprep.mubr.f32.mxu0 0.0
    %781 = vmatmul.mubr.f32.gmra.mrb[0].mxu0 %v154
    %v782 = vpop.f32.mrb[0].mxu0
    %v783 = vadd.f32 0.0, %v782
    %v784 = vpop.f32.mrb[0].mxu0
    %785 = vmatprep.mubr.f32.mxu0 0.0
    %786 = vmatmul.mubr.f32.gmra.mrb[0].mxu0 %v155
    %v787 = vpop.f32.mrb[0].mxu0
    %v788 = vadd.f32 0.0, %v787
    %v789 = vpop.f32.mrb[0].mxu0
    %790 = vmatprep.mubr.f32.mxu0 0.0
    %791 = vmatmul.mubr.f32.gmra.mrb[0].mxu0 %v156
    %v792 = vpop.f32.mrb[0].mxu0
    %v793 = vadd.f32 0.0, %v792
    %v794 = vpop.f32.mrb[0].mxu0
    %795 = vmatprep.mubr.f32.mxu0 0.0
    %796 = vmatmul.mubr.f32.gmra.mrb[0].mxu0 %v157
    %v797 = vpop.f32.mrb[0].mxu0
    %v798 = vadd.f32 0.0, %v797
    %v799 = vpop.f32.mrb[0].mxu0
    %800 = vmatprep.mubr.f32.mxu0 0.0
    %801 = vmatmul.mubr.f32.gmra.mrb[0].mxu0 %v158
    %v802 = vpop.f32.mrb[0].mxu0
    %v803 = vadd.f32 0.0, %v802
    %v804 = vpop.f32.mrb[0].mxu0
    %805 = vmatprep.mubr.f32.mxu0 0.0
    %806 = vmatmul.mubr.f32.gmra.mrb[0].mxu0 %v159
    %v807 = vpop.f32.mrb[0].mxu0
    %v808 = vadd.f32 0.0, %v807
    %v809 = vpop.f32.mrb[0].mxu0
    %810 = vmatprep.mubr.f32.mxu0 0.0
    %811 = vmatmul.mubr.f32.gmra.mrb[0].mxu0 %v160
    %v812 = vpop.f32.mrb[0].mxu0
    %v813 = vadd.f32 0.0, %v812
    %v814 = vpop.f32.mrb[0].mxu0
    %815 = vmatprep.mubr.f32.mxu0 0.0
    %816 = vmatmul.mubr.f32.gmra.mrb[0].mxu0 %v161
    %v817 = vpop.f32.mrb[0].mxu0
    %v818 = vadd.f32 0.0, %v817
    %v819 = vpop.f32.mrb[0].mxu0
    %820 = vmatprep.mubr.f32.mxu0 0.0
    %821 = vmatmul.mubr.f32.gmra.mrb[0].mxu0 %v162
    %v822 = vpop.f32.mrb[0].mxu0
    %v823 = vadd.f32 0.0, %v822
    %v824 = vpop.f32.mrb[0].mxu0
    %825 = vmatprep.mubr.f32.mxu0 0.0
    %826 = vmatmul.mubr.f32.gmra.mrb[0].mxu0 %v163
    %v827 = vpop.f32.mrb[0].mxu0
    %v828 = vadd.f32 0.0, %v827
    %v829 = vpop.f32.mrb[0].mxu0
    %830 = vdwg.mxu0
    %v831 = vld [vmem:[#allocation10] sm:$0xff]
    %v832 = vld [vmem:[#allocation10 + $0x8] sm:$0xff]
    %v833 = vld [vmem:[#allocation10 + $0x10] sm:$0xff]
    %v834 = vld [vmem:[#allocation10 + $0x18] sm:$0xff]
    %v835 = vld [vmem:[#allocation10 + $0x20] sm:$0xff]
    %v836 = vld [vmem:[#allocation10 + $0x28] sm:$0xff]
    %v837 = vld [vmem:[#allocation10 + $0x30] sm:$0xff]
    %v838 = vld [vmem:[#allocation10 + $0x38] sm:$0xff]
    %v839 = vld [vmem:[#allocation10 + $0x40] sm:$0xff]
    %v840 = vld [vmem:[#allocation10 + $0x48] sm:$0xff]
    %v841 = vld [vmem:[#allocation10 + $0x50] sm:$0xff]
    %v842 = vld [vmem:[#allocation10 + $0x58] sm:$0xff]
    %v843 = vld [vmem:[#allocation10 + $0x60] sm:$0xff]
    %v844 = vld [vmem:[#allocation10 + $0x68] sm:$0xff]
    %v845 = vld [vmem:[#allocation10 + $0x70] sm:$0xff]
    %v846 = vld [vmem:[#allocation10 + $0x78] sm:$0xff]
    %v847 = vld [vmem:[#allocation11] sm:$0xff]
    %v848 = vld [vmem:[#allocation11 + $0x8] sm:$0xff]
    %v849 = vld [vmem:[#allocation11 + $0x10] sm:$0xff]
    %v850 = vld [vmem:[#allocation11 + $0x18] sm:$0xff]
    %v851 = vld [vmem:[#allocation11 + $0x20] sm:$0xff]
    %v852 = vld [vmem:[#allocation11 + $0x28] sm:$0xff]
    %v853 = vld [vmem:[#allocation11 + $0x30] sm:$0xff]
    %v854 = vld [vmem:[#allocation11 + $0x38] sm:$0xff]
    %v855 = vld [vmem:[#allocation11 + $0x40] sm:$0xff]
    %v856 = vld [vmem:[#allocation11 + $0x48] sm:$0xff]
    %v857 = vld [vmem:[#allocation11 + $0x50] sm:$0xff]
    %v858 = vld [vmem:[#allocation11 + $0x58] sm:$0xff]
    %v859 = vld [vmem:[#allocation11 + $0x60] sm:$0xff]
    %v860 = vld [vmem:[#allocation11 + $0x68] sm:$0xff]
    %v861 = vld [vmem:[#allocation11 + $0x70] sm:$0xff]
    %v862 = vld [vmem:[#allocation11 + $0x78] sm:$0xff]
    %863 = vmatprep.subr.mxu0 0.0
    %864 = vmatpush1.msra.mxu0 %v847
    %865 = vmatprep.subr.mxu0 0.0
    %866 = vmatpush1.msra.mxu0 %v848
    %867 = vmatprep.subr.mxu0 0.0
    %868 = vmatpush1.msra.mxu0 %v849
    %869 = vmatprep.subr.mxu0 0.0
    %870 = vmatpush1.msra.mxu0 %v850
    %871 = vmatprep.subr.mxu0 0.0
    %872 = vmatpush1.msra.mxu0 %v851
    %873 = vmatprep.subr.mxu0 0.0
    %874 = vmatpush1.msra.mxu0 %v852
    %875 = vmatprep.subr.mxu0 0.0
    %876 = vmatpush1.msra.mxu0 %v853
    %877 = vmatprep.subr.mxu0 0.0
    %878 = vmatpush1.msra.mxu0 %v854
    %879 = vmatprep.subr.mxu0 0.0
    %880 = vmatpush1.msra.mxu0 %v855
    %881 = vmatprep.subr.mxu0 0.0
    %882 = vmatpush1.msra.mxu0 %v856
    %883 = vmatprep.subr.mxu0 0.0
    %884 = vmatpush1.msra.mxu0 %v857
    %885 = vmatprep.subr.mxu0 0.0
    %886 = vmatpush1.msra.mxu0 %v858
    %887 = vmatprep.subr.mxu0 0.0
    %888 = vmatpush1.msra.mxu0 %v859
    %889 = vmatprep.subr.mxu0 0.0
    %890 = vmatpush1.msra.mxu0 %v860
    %891 = vmatprep.subr.mxu0 0.0
    %892 = vmatpush1.msra.mxu0 %v861
    %893 = vmatprep.subr.mxu0 0.0
    %894 = vmatpush1.msra.mxu0 %v862
    %895 = vmatprep.subr.mxu0 0.0
    %896 = vmatpush1.msra.mxu0 0.0
    %897 = vmatprep.subr.mxu0 0.0
    %898 = vmatpush1.msra.mxu0 0.0
    %899 = vmatprep.subr.mxu0 0.0
    %900 = vmatpush1.msra.mxu0 0.0
    %901 = vmatprep.subr.mxu0 0.0
    %902 = vmatpush1.msra.mxu0 0.0
    %903 = vmatprep.subr.mxu0 0.0
    %904 = vmatpush1.msra.mxu0 0.0
    %905 = vmatprep.subr.mxu0 0.0
    %906 = vmatpush1.msra.mxu0 0.0
    %907 = vmatprep.subr.mxu0 0.0
    %908 = vmatpush1.msra.mxu0 0.0
    %909 = vmatprep.subr.mxu0 0.0
    %910 = vmatpush1.msra.mxu0 0.0
    %911 = vmatprep.subr.mxu0 0.0
    %912 = vmatpush1.msra.mxu0 0.0
    %913 = vmatprep.subr.mxu0 0.0
    %914 = vmatpush1.msra.mxu0 0.0
    %915 = vmatprep.subr.mxu0 0.0
    %916 = vmatpush1.msra.mxu0 0.0
    %917 = vmatprep.subr.mxu0 0.0
    %918 = vmatpush1.msra.mxu0 0.0
    %919 = vmatprep.subr.mxu0 0.0
    %920 = vmatpush1.msra.mxu0 0.0
    %921 = vmatprep.subr.mxu0 0.0
    %922 = vmatpush1.msra.mxu0 0.0
    %923 = vmatprep.subr.mxu0 0.0
    %924 = vmatpush1.msra.mxu0 0.0
    %925 = vmatprep.subr.mxu0 0.0
    %926 = vmatpush1.msra.mxu0 0.0
    %927 = vmatprep.mubr.f32.mxu0 0.0
    %928 = vmatmul.mubr.f32.gmra.mrb[0].mxu0 %v670
    %v929 = vpop.f32.mrb[0].mxu0
    %v930 = vadd.f32 0.0, %v929
    %v931 = vpop.f32.mrb[0].mxu0
    %932 = vmatprep.mubr.f32.mxu0 0.0
    %933 = vmatmul.mubr.f32.gmra.mrb[0].mxu0 %v671
    %v934 = vpop.f32.mrb[0].mxu0
    %v935 = vadd.f32 0.0, %v934
    %v936 = vpop.f32.mrb[0].mxu0
    %937 = vmatprep.mubr.f32.mxu0 0.0
    %938 = vmatmul.mubr.f32.gmra.mrb[0].mxu0 %v672
    %v939 = vpop.f32.mrb[0].mxu0
    %v940 = vadd.f32 0.0, %v939
    %v941 = vpop.f32.mrb[0].mxu0
    %942 = vmatprep.mubr.f32.mxu0 0.0
    %943 = vmatmul.mubr.f32.gmra.mrb[0].mxu0 %v673
    %v944 = vpop.f32.mrb[0].mxu0
    %v945 = vadd.f32 0.0, %v944
    %v946 = vpop.f32.mrb[0].mxu0
    %947 = vmatprep.mubr.f32.mxu0 0.0
    %948 = vmatmul.mubr.f32.gmra.mrb[0].mxu0 %v674
    %v949 = vpop.f32.mrb[0].mxu0
    %v950 = vadd.f32 0.0, %v949
    %v951 = vpop.f32.mrb[0].mxu0
    %952 = vmatprep.mubr.f32.mxu0 0.0
    %953 = vmatmul.mubr.f32.gmra.mrb[0].mxu0 %v675
    %v954 = vpop.f32.mrb[0].mxu0
    %v955 = vadd.f32 0.0, %v954
    %v956 = vpop.f32.mrb[0].mxu0
    %957 = vmatprep.mubr.f32.mxu0 0.0
    %958 = vmatmul.mubr.f32.gmra.mrb[0].mxu0 %v676
    %v959 = vpop.f32.mrb[0].mxu0
    %v960 = vadd.f32 0.0, %v959
    %v961 = vpop.f32.mrb[0].mxu0
    %962 = vmatprep.mubr.f32.mxu0 0.0
    %963 = vmatmul.mubr.f32.gmra.mrb[0].mxu0 %v677
    %v964 = vpop.f32.mrb[0].mxu0
    %v965 = vadd.f32 0.0, %v964
    %v966 = vpop.f32.mrb[0].mxu0
    %967 = vmatprep.mubr.f32.mxu0 0.0
    %968 = vmatmul.mubr.f32.gmra.mrb[0].mxu0 %v678
    %v969 = vpop.f32.mrb[0].mxu0
    %v970 = vadd.f32 0.0, %v969
    %v971 = vpop.f32.mrb[0].mxu0
    %972 = vmatprep.mubr.f32.mxu0 0.0
    %973 = vmatmul.mubr.f32.gmra.mrb[0].mxu0 %v679
    %v974 = vpop.f32.mrb[0].mxu0
    %v975 = vadd.f32 0.0, %v974
    %v976 = vpop.f32.mrb[0].mxu0
    %977 = vmatprep.mubr.f32.mxu0 0.0
    %978 = vmatmul.mubr.f32.gmra.mrb[0].mxu0 %v680
    %v979 = vpop.f32.mrb[0].mxu0
    %v980 = vadd.f32 0.0, %v979
    %v981 = vpop.f32.mrb[0].mxu0
    %982 = vmatprep.mubr.f32.mxu0 0.0
    %983 = vmatmul.mubr.f32.gmra.mrb[0].mxu0 %v681
    %v984 = vpop.f32.mrb[0].mxu0
    %v985 = vadd.f32 0.0, %v984
    %v986 = vpop.f32.mrb[0].mxu0
    %987 = vmatprep.mubr.f32.mxu0 0.0
    %988 = vmatmul.mubr.f32.gmra.mrb[0].mxu0 %v682
    %v989 = vpop.f32.mrb[0].mxu0
    %v990 = vadd.f32 0.0, %v989
    %v991 = vpop.f32.mrb[0].mxu0
    %992 = vmatprep.mubr.f32.mxu0 0.0
    %993 = vmatmul.mubr.f32.gmra.mrb[0].mxu0 %v683
    %v994 = vpop.f32.mrb[0].mxu0
    %v995 = vadd.f32 0.0, %v994
    %v996 = vpop.f32.mrb[0].mxu0
    %997 = vmatprep.mubr.f32.mxu0 0.0
    %998 = vmatmul.mubr.f32.gmra.mrb[0].mxu0 %v684
    %v999 = vpop.f32.mrb[0].mxu0
    %v1000 = vadd.f32 0.0, %v999
    %v1001 = vpop.f32.mrb[0].mxu0
    %1002 = vmatprep.mubr.f32.mxu0 0.0
    %1003 = vmatmul.mubr.f32.gmra.mrb[0].mxu0 %v685
    %v1004 = vpop.f32.mrb[0].mxu0
    %v1005 = vadd.f32 0.0, %v1004
    %v1006 = vpop.f32.mrb[0].mxu0
    %1007 = vdwg.mxu0
    %1008 = vmatprep.subr.mxu0 0.0
    %1009 = vmatpush1.msra.mxu0 %v831
    %1010 = vmatprep.subr.mxu0 0.0
    %1011 = vmatpush1.msra.mxu0 %v832
    %1012 = vmatprep.subr.mxu0 0.0
    %1013 = vmatpush1.msra.mxu0 %v833
    %1014 = vmatprep.subr.mxu0 0.0
    %1015 = vmatpush1.msra.mxu0 %v834
    %1016 = vmatprep.subr.mxu0 0.0
    %1017 = vmatpush1.msra.mxu0 %v835
    %1018 = vmatprep.subr.mxu0 0.0
    %1019 = vmatpush1.msra.mxu0 %v836
    %1020 = vmatprep.subr.mxu0 0.0
    %1021 = vmatpush1.msra.mxu0 %v837
    %1022 = vmatprep.subr.mxu0 0.0
    %1023 = vmatpush1.msra.mxu0 %v838
    %1024 = vmatprep.subr.mxu0 0.0
    %1025 = vmatpush1.msra.mxu0 %v839
    %1026 = vmatprep.subr.mxu0 0.0
    %1027 = vmatpush1.msra.mxu0 %v840
    %1028 = vmatprep.subr.mxu0 0.0
    %1029 = vmatpush1.msra.mxu0 %v841
    %1030 = vmatprep.subr.mxu0 0.0
    %1031 = vmatpush1.msra.mxu0 %v842
    %1032 = vmatprep.subr.mxu0 0.0
    %1033 = vmatpush1.msra.mxu0 %v843
    %1034 = vmatprep.subr.mxu0 0.0
    %1035 = vmatpush1.msra.mxu0 %v844
    %1036 = vmatprep.subr.mxu0 0.0
    %1037 = vmatpush1.msra.mxu0 %v845
    %1038 = vmatprep.subr.mxu0 0.0
    %1039 = vmatpush1.msra.mxu0 %v846
    %1040 = vmatprep.subr.mxu0 0.0
    %1041 = vmatpush1.msra.mxu0 0.0
    %1042 = vmatprep.subr.mxu0 0.0
    %1043 = vmatpush1.msra.mxu0 0.0
    %1044 = vmatprep.subr.mxu0 0.0
    %1045 = vmatpush1.msra.mxu0 0.0
    %1046 = vmatprep.subr.mxu0 0.0
    %1047 = vmatpush1.msra.mxu0 0.0
    %1048 = vmatprep.subr.mxu0 0.0
    %1049 = vmatpush1.msra.mxu0 0.0
    %1050 = vmatprep.subr.mxu0 0.0
    %1051 = vmatpush1.msra.mxu0 0.0
    %1052 = vmatprep.subr.mxu0 0.0
    %1053 = vmatpush1.msra.mxu0 0.0
    %1054 = vmatprep.subr.mxu0 0.0
    %1055 = vmatpush1.msra.mxu0 0.0
    %1056 = vmatprep.subr.mxu0 0.0
    %1057 = vmatpush1.msra.mxu0 0.0
    %1058 = vmatprep.subr.mxu0 0.0
    %1059 = vmatpush1.msra.mxu0 0.0
    %1060 = vmatprep.subr.mxu0 0.0
    %1061 = vmatpush1.msra.mxu0 0.0
    %1062 = vmatprep.subr.mxu0 0.0
    %1063 = vmatpush1.msra.mxu0 0.0
    %1064 = vmatprep.subr.mxu0 0.0
    %1065 = vmatpush1.msra.mxu0 0.0
    %1066 = vmatprep.subr.mxu0 0.0
    %1067 = vmatpush1.msra.mxu0 0.0
    %1068 = vmatprep.subr.mxu0 0.0
    %1069 = vmatpush1.msra.mxu0 0.0
    %1070 = vmatprep.subr.mxu0 0.0
    %1071 = vmatpush1.msra.mxu0 0.0
    %1072 = vmatprep.mubr.f32.mxu0 0.0
    %1073 = vmatmul.mubr.f32.gmra.mrb[0].mxu0 %v753
    %v1074 = vpop.f32.mrb[0].mxu0
    %v1075 = vadd.f32 %v930, %v1074
    %v1076 = vpop.f32.mrb[0].mxu0
    %1077 = vmatprep.mubr.f32.mxu0 0.0
    %1078 = vmatmul.mubr.f32.gmra.mrb[0].mxu0 %v758
    %v1079 = vpop.f32.mrb[0].mxu0
    %v1080 = vadd.f32 %v935, %v1079
    %v1081 = vpop.f32.mrb[0].mxu0
    %1082 = vmatprep.mubr.f32.mxu0 0.0
    %1083 = vmatmul.mubr.f32.gmra.mrb[0].mxu0 %v763
    %v1084 = vpop.f32.mrb[0].mxu0
    %v1085 = vadd.f32 %v940, %v1084
    %v1086 = vpop.f32.mrb[0].mxu0
    %1087 = vmatprep.mubr.f32.mxu0 0.0
    %1088 = vmatmul.mubr.f32.gmra.mrb[0].mxu0 %v768
    %v1089 = vpop.f32.mrb[0].mxu0
    %v1090 = vadd.f32 %v945, %v1089
    %v1091 = vpop.f32.mrb[0].mxu0
    %1092 = vmatprep.mubr.f32.mxu0 0.0
    %1093 = vmatmul.mubr.f32.gmra.mrb[0].mxu0 %v773
    %v1094 = vpop.f32.mrb[0].mxu0
    %v1095 = vadd.f32 %v950, %v1094
    %v1096 = vpop.f32.mrb[0].mxu0
    %1097 = vmatprep.mubr.f32.mxu0 0.0
    %1098 = vmatmul.mubr.f32.gmra.mrb[0].mxu0 %v778
    %v1099 = vpop.f32.mrb[0].mxu0
    %v1100 = vadd.f32 %v955, %v1099
    %v1101 = vpop.f32.mrb[0].mxu0
    %1102 = vmatprep.mubr.f32.mxu0 0.0
    %1103 = vmatmul.mubr.f32.gmra.mrb[0].mxu0 %v783
    %v1104 = vpop.f32.mrb[0].mxu0
    %v1105 = vadd.f32 %v960, %v1104
    %v1106 = vpop.f32.mrb[0].mxu0
    %1107 = vmatprep.mubr.f32.mxu0 0.0
    %1108 = vmatmul.mubr.f32.gmra.mrb[0].mxu0 %v788
    %v1109 = vpop.f32.mrb[0].mxu0
    %v1110 = vadd.f32 %v965, %v1109
    %v1111 = vpop.f32.mrb[0].mxu0
    %1112 = vmatprep.mubr.f32.mxu0 0.0
    %1113 = vmatmul.mubr.f32.gmra.mrb[0].mxu0 %v793
    %v1114 = vpop.f32.mrb[0].mxu0
    %v1115 = vadd.f32 %v970, %v1114
    %v1116 = vpop.f32.mrb[0].mxu0
    %1117 = vmatprep.mubr.f32.mxu0 0.0
    %1118 = vmatmul.mubr.f32.gmra.mrb[0].mxu0 %v798
    %v1119 = vpop.f32.mrb[0].mxu0
    %v1120 = vadd.f32 %v975, %v1119
    %v1121 = vpop.f32.mrb[0].mxu0
    %1122 = vmatprep.mubr.f32.mxu0 0.0
    %1123 = vmatmul.mubr.f32.gmra.mrb[0].mxu0 %v803
    %v1124 = vpop.f32.mrb[0].mxu0
    %v1125 = vadd.f32 %v980, %v1124
    %v1126 = vpop.f32.mrb[0].mxu0
    %1127 = vmatprep.mubr.f32.mxu0 0.0
    %1128 = vmatmul.mubr.f32.gmra.mrb[0].mxu0 %v808
    %v1129 = vpop.f32.mrb[0].mxu0
    %v1130 = vadd.f32 %v985, %v1129
    %v1131 = vpop.f32.mrb[0].mxu0
    %1132 = vmatprep.mubr.f32.mxu0 0.0
    %1133 = vmatmul.mubr.f32.gmra.mrb[0].mxu0 %v813
    %v1134 = vpop.f32.mrb[0].mxu0
    %v1135 = vadd.f32 %v990, %v1134
    %v1136 = vpop.f32.mrb[0].mxu0
    %1137 = vmatprep.mubr.f32.mxu0 0.0
    %1138 = vmatmul.mubr.f32.gmra.mrb[0].mxu0 %v818
    %v1139 = vpop.f32.mrb[0].mxu0
    %v1140 = vadd.f32 %v995, %v1139
    %v1141 = vpop.f32.mrb[0].mxu0
    %1142 = vmatprep.mubr.f32.mxu0 0.0
    %1143 = vmatmul.mubr.f32.gmra.mrb[0].mxu0 %v823
    %v1144 = vpop.f32.mrb[0].mxu0
    %v1145 = vadd.f32 %v1000, %v1144
    %v1146 = vpop.f32.mrb[0].mxu0
    %1147 = vmatprep.mubr.f32.mxu0 0.0
    %1148 = vmatmul.mubr.f32.gmra.mrb[0].mxu0 %v828
    %v1149 = vpop.f32.mrb[0].mxu0
    %v1150 = vadd.f32 %v1005, %v1149
    %v1151 = vpop.f32.mrb[0].mxu0
    %1152 = vdwg.mxu0
    %v1153 = vld [vmem:[%s7] sm:$0x1]
    %v1155 = vlaneseq
    %v1156 = vshrl.u32 %v1155, 7
    %v1157 = vsub.s32 0, %v1156
    %v1158 = vrot.slane %v1153, %v1157
    %v1160 = vadd.f32 %v1075, %v1158
    %v1161 = vadd.f32 %v1080, %v1158
    %v1162 = vadd.f32 %v1085, %v1158
    %v1163 = vadd.f32 %v1090, %v1158
    %v1164 = vadd.f32 %v1095, %v1158
    %v1165 = vadd.f32 %v1100, %v1158
    %v1166 = vadd.f32 %v1105, %v1158
    %v1167 = vadd.f32 %v1110, %v1158
    %v1168 = vadd.f32 %v1115, %v1158
    %v1169 = vadd.f32 %v1120, %v1158
    %v1170 = vadd.f32 %v1125, %v1158
    %v1171 = vadd.f32 %v1130, %v1158
    %v1172 = vadd.f32 %v1135, %v1158
    %v1173 = vadd.f32 %v1140, %v1158
    %v1174 = vadd.f32 %v1145, %v1158
    %v1175 = vadd.f32 %v1150, %v1158
    %v1176 = vmax.f32 %v1160, 0.0
    %v1177 = vmax.f32 %v1161, 0.0
    %v1178 = vmax.f32 %v1162, 0.0
    %v1179 = vmax.f32 %v1163, 0.0
    %v1180 = vmax.f32 %v1164, 0.0
    %v1181 = vmax.f32 %v1165, 0.0
    %v1182 = vmax.f32 %v1166, 0.0
    %v1183 = vmax.f32 %v1167, 0.0
    %v1184 = vmax.f32 %v1168, 0.0
    %v1185 = vmax.f32 %v1169, 0.0
    %v1186 = vmax.f32 %v1170, 0.0
    %v1187 = vmax.f32 %v1171, 0.0
    %v1188 = vmax.f32 %v1172, 0.0
    %v1189 = vmax.f32 %v1173, 0.0
    %v1190 = vmax.f32 %v1174, 0.0
    %v1191 = vmax.f32 %v1175, 0.0
    %1192 = vmatprep.subr.mxu0 0.0
    %1193 = vmatpush1.msra.mxu0 %v1176
    %1194 = vmatprep.subr.mxu0 0.0
    %1195 = vmatpush1.msra.mxu0 %v1177
    %1196 = vmatprep.subr.mxu0 0.0
    %1197 = vmatpush1.msra.mxu0 %v1178
    %1198 = vmatprep.subr.mxu0 0.0
    %1199 = vmatpush1.msra.mxu0 %v1179
    %1200 = vmatprep.subr.mxu0 0.0
    %1201 = vmatpush1.msra.mxu0 %v1180
    %1202 = vmatprep.subr.mxu0 0.0
    %1203 = vmatpush1.msra.mxu0 %v1181
    %1204 = vmatprep.subr.mxu0 0.0
    %1205 = vmatpush1.msra.mxu0 %v1182
    %1206 = vmatprep.subr.mxu0 0.0
    %1207 = vmatpush1.msra.mxu0 %v1183
    %1208 = vmatprep.subr.mxu0 0.0
    %1209 = vmatpush1.msra.mxu0 %v1184
    %1210 = vmatprep.subr.mxu0 0.0
    %1211 = vmatpush1.msra.mxu0 %v1185
    %1212 = vmatprep.subr.mxu0 0.0
    %1213 = vmatpush1.msra.mxu0 %v1186
    %1214 = vmatprep.subr.mxu0 0.0
    %1215 = vmatpush1.msra.mxu0 %v1187
    %1216 = vmatprep.subr.mxu0 0.0
    %1217 = vmatpush1.msra.mxu0 %v1188
    %1218 = vmatprep.subr.mxu0 0.0
    %1219 = vmatpush1.msra.mxu0 %v1189
    %1220 = vmatprep.subr.mxu0 0.0
    %1221 = vmatpush1.msra.mxu0 %v1190
    %1222 = vmatprep.subr.mxu0 0.0
    %1223 = vmatpush1.msra.mxu0 %v1191
    %1224 = vmatprep.subr.mxu0 0.0
    %1225 = vmatpush1.msra.mxu0 0.0
    %1226 = vmatprep.subr.mxu0 0.0
    %1227 = vmatpush1.msra.mxu0 0.0
    %1228 = vmatprep.subr.mxu0 0.0
    %1229 = vmatpush1.msra.mxu0 0.0
    %1230 = vmatprep.subr.mxu0 0.0
    %1231 = vmatpush1.msra.mxu0 0.0
    %1232 = vmatprep.subr.mxu0 0.0
    %1233 = vmatpush1.msra.mxu0 0.0
    %1234 = vmatprep.subr.mxu0 0.0
    %1235 = vmatpush1.msra.mxu0 0.0
    %1236 = vmatprep.subr.mxu0 0.0
    %1237 = vmatpush1.msra.mxu0 0.0
    %1238 = vmatprep.subr.mxu0 0.0
    %1239 = vmatpush1.msra.mxu0 0.0
    %1240 = vmatprep.subr.mxu0 0.0
    %1241 = vmatpush1.msra.mxu0 0.0
    %1242 = vmatprep.subr.mxu0 0.0
    %1243 = vmatpush1.msra.mxu0 0.0
    %1244 = vmatprep.subr.mxu0 0.0
    %1245 = vmatpush1.msra.mxu0 0.0
    %1246 = vmatprep.subr.mxu0 0.0
    %1247 = vmatpush1.msra.mxu0 0.0
    %1248 = vmatprep.subr.mxu0 0.0
    %1249 = vmatpush1.msra.mxu0 0.0
    %1250 = vmatprep.subr.mxu0 0.0
    %1251 = vmatpush1.msra.mxu0 0.0
    %1252 = vmatprep.subr.mxu0 0.0
    %1253 = vmatpush1.msra.mxu0 0.0
    %1254 = vmatprep.subr.mxu0 0.0
    %1255 = vmatpush1.msra.mxu0 0.0
    %1256 = vmatprep.mubr.f32.mxu0 0.0
    %1257 = vmatmul.mubr.f32.gmra.mrb[0].mxu0 %v148
    %v1258 = vpop.f32.mrb[0].mxu0
    %v1259 = vadd.f32 0.0, %v1258
    %v1260 = vpop.f32.mrb[0].mxu0
    %1261 = vmatprep.mubr.f32.mxu0 0.0
    %1262 = vmatmul.mubr.f32.gmra.mrb[0].mxu0 %v149
    %v1263 = vpop.f32.mrb[0].mxu0
    %v1264 = vadd.f32 0.0, %v1263
    %v1265 = vpop.f32.mrb[0].mxu0
    %1266 = vmatprep.mubr.f32.mxu0 0.0
    %1267 = vmatmul.mubr.f32.gmra.mrb[0].mxu0 %v150
    %v1268 = vpop.f32.mrb[0].mxu0
    %v1269 = vadd.f32 0.0, %v1268
    %v1270 = vpop.f32.mrb[0].mxu0
    %1271 = vmatprep.mubr.f32.mxu0 0.0
    %1272 = vmatmul.mubr.f32.gmra.mrb[0].mxu0 %v151
    %v1273 = vpop.f32.mrb[0].mxu0
    %v1274 = vadd.f32 0.0, %v1273
    %v1275 = vpop.f32.mrb[0].mxu0
    %1276 = vmatprep.mubr.f32.mxu0 0.0
    %1277 = vmatmul.mubr.f32.gmra.mrb[0].mxu0 %v152
    %v1278 = vpop.f32.mrb[0].mxu0
    %v1279 = vadd.f32 0.0, %v1278
    %v1280 = vpop.f32.mrb[0].mxu0
    %1281 = vmatprep.mubr.f32.mxu0 0.0
    %1282 = vmatmul.mubr.f32.gmra.mrb[0].mxu0 %v153
    %v1283 = vpop.f32.mrb[0].mxu0
    %v1284 = vadd.f32 0.0, %v1283
    %v1285 = vpop.f32.mrb[0].mxu0
    %1286 = vmatprep.mubr.f32.mxu0 0.0
    %1287 = vmatmul.mubr.f32.gmra.mrb[0].mxu0 %v154
    %v1288 = vpop.f32.mrb[0].mxu0
    %v1289 = vadd.f32 0.0, %v1288
    %v1290 = vpop.f32.mrb[0].mxu0
    %1291 = vmatprep.mubr.f32.mxu0 0.0
    %1292 = vmatmul.mubr.f32.gmra.mrb[0].mxu0 %v155
    %v1293 = vpop.f32.mrb[0].mxu0
    %v1294 = vadd.f32 0.0, %v1293
    %v1295 = vpop.f32.mrb[0].mxu0
    %1296 = vmatprep.mubr.f32.mxu0 0.0
    %1297 = vmatmul.mubr.f32.gmra.mrb[0].mxu0 %v156
    %v1298 = vpop.f32.mrb[0].mxu0
    %v1299 = vadd.f32 0.0, %v1298
    %v1300 = vpop.f32.mrb[0].mxu0
    %1301 = vmatprep.mubr.f32.mxu0 0.0
    %1302 = vmatmul.mubr.f32.gmra.mrb[0].mxu0 %v157
    %v1303 = vpop.f32.mrb[0].mxu0
    %v1304 = vadd.f32 0.0, %v1303
    %v1305 = vpop.f32.mrb[0].mxu0
    %1306 = vmatprep.mubr.f32.mxu0 0.0
    %1307 = vmatmul.mubr.f32.gmra.mrb[0].mxu0 %v158
    %v1308 = vpop.f32.mrb[0].mxu0
    %v1309 = vadd.f32 0.0, %v1308
    %v1310 = vpop.f32.mrb[0].mxu0
    %1311 = vmatprep.mubr.f32.mxu0 0.0
    %1312 = vmatmul.mubr.f32.gmra.mrb[0].mxu0 %v159
    %v1313 = vpop.f32.mrb[0].mxu0
    %v1314 = vadd.f32 0.0, %v1313
    %v1315 = vpop.f32.mrb[0].mxu0
    %1316 = vmatprep.mubr.f32.mxu0 0.0
    %1317 = vmatmul.mubr.f32.gmra.mrb[0].mxu0 %v160
    %v1318 = vpop.f32.mrb[0].mxu0
    %v1319 = vadd.f32 0.0, %v1318
    %v1320 = vpop.f32.mrb[0].mxu0
    %1321 = vmatprep.mubr.f32.mxu0 0.0
    %1322 = vmatmul.mubr.f32.gmra.mrb[0].mxu0 %v161
    %v1323 = vpop.f32.mrb[0].mxu0
    %v1324 = vadd.f32 0.0, %v1323
    %v1325 = vpop.f32.mrb[0].mxu0
    %1326 = vmatprep.mubr.f32.mxu0 0.0
    %1327 = vmatmul.mubr.f32.gmra.mrb[0].mxu0 %v162
    %v1328 = vpop.f32.mrb[0].mxu0
    %v1329 = vadd.f32 0.0, %v1328
    %v1330 = vpop.f32.mrb[0].mxu0
    %1331 = vmatprep.mubr.f32.mxu0 0.0
    %1332 = vmatmul.mubr.f32.gmra.mrb[0].mxu0 %v163
    %v1333 = vpop.f32.mrb[0].mxu0
    %v1334 = vadd.f32 0.0, %v1333
    %v1335 = vpop.f32.mrb[0].mxu0
    %1336 = vdwg.mxu0
    %v1337 = vld [vmem:[#allocation13] sm:$0xff]
    %v1338 = vld [vmem:[#allocation13 + $0x8] sm:$0xff]
    %v1339 = vld [vmem:[#allocation13 + $0x10] sm:$0xff]
    %v1340 = vld [vmem:[#allocation13 + $0x18] sm:$0xff]
    %v1341 = vld [vmem:[#allocation13 + $0x20] sm:$0xff]
    %v1342 = vld [vmem:[#allocation13 + $0x28] sm:$0xff]
    %v1343 = vld [vmem:[#allocation13 + $0x30] sm:$0xff]
    %v1344 = vld [vmem:[#allocation13 + $0x38] sm:$0xff]
    %v1345 = vld [vmem:[#allocation13 + $0x40] sm:$0xff]
    %v1346 = vld [vmem:[#allocation13 + $0x48] sm:$0xff]
    %v1347 = vld [vmem:[#allocation13 + $0x50] sm:$0xff]
    %v1348 = vld [vmem:[#allocation13 + $0x58] sm:$0xff]
    %v1349 = vld [vmem:[#allocation13 + $0x60] sm:$0xff]
    %v1350 = vld [vmem:[#allocation13 + $0x68] sm:$0xff]
    %v1351 = vld [vmem:[#allocation13 + $0x70] sm:$0xff]
    %v1352 = vld [vmem:[#allocation13 + $0x78] sm:$0xff]
    %v1353 = vld [vmem:[#allocation14] sm:$0xff]
    %v1354 = vld [vmem:[#allocation14 + $0x8] sm:$0xff]
    %v1355 = vld [vmem:[#allocation14 + $0x10] sm:$0xff]
    %v1356 = vld [vmem:[#allocation14 + $0x18] sm:$0xff]
    %v1357 = vld [vmem:[#allocation14 + $0x20] sm:$0xff]
    %v1358 = vld [vmem:[#allocation14 + $0x28] sm:$0xff]
    %v1359 = vld [vmem:[#allocation14 + $0x30] sm:$0xff]
    %v1360 = vld [vmem:[#allocation14 + $0x38] sm:$0xff]
    %v1361 = vld [vmem:[#allocation14 + $0x40] sm:$0xff]
    %v1362 = vld [vmem:[#allocation14 + $0x48] sm:$0xff]
    %v1363 = vld [vmem:[#allocation14 + $0x50] sm:$0xff]
    %v1364 = vld [vmem:[#allocation14 + $0x58] sm:$0xff]
    %v1365 = vld [vmem:[#allocation14 + $0x60] sm:$0xff]
    %v1366 = vld [vmem:[#allocation14 + $0x68] sm:$0xff]
    %v1367 = vld [vmem:[#allocation14 + $0x70] sm:$0xff]
    %v1368 = vld [vmem:[#allocation14 + $0x78] sm:$0xff]
    %1369 = vmatprep.subr.mxu0 0.0
    %1370 = vmatpush1.msra.mxu0 %v1353
    %1371 = vmatprep.subr.mxu0 0.0
    %1372 = vmatpush1.msra.mxu0 %v1354
    %1373 = vmatprep.subr.mxu0 0.0
    %1374 = vmatpush1.msra.mxu0 %v1355
    %1375 = vmatprep.subr.mxu0 0.0
    %1376 = vmatpush1.msra.mxu0 %v1356
    %1377 = vmatprep.subr.mxu0 0.0
    %1378 = vmatpush1.msra.mxu0 %v1357
    %1379 = vmatprep.subr.mxu0 0.0
    %1380 = vmatpush1.msra.mxu0 %v1358
    %1381 = vmatprep.subr.mxu0 0.0
    %1382 = vmatpush1.msra.mxu0 %v1359
    %1383 = vmatprep.subr.mxu0 0.0
    %1384 = vmatpush1.msra.mxu0 %v1360
    %1385 = vmatprep.subr.mxu0 0.0
    %1386 = vmatpush1.msra.mxu0 %v1361
    %1387 = vmatprep.subr.mxu0 0.0
    %1388 = vmatpush1.msra.mxu0 %v1362
    %1389 = vmatprep.subr.mxu0 0.0
    %1390 = vmatpush1.msra.mxu0 %v1363
    %1391 = vmatprep.subr.mxu0 0.0
    %1392 = vmatpush1.msra.mxu0 %v1364
    %1393 = vmatprep.subr.mxu0 0.0
    %1394 = vmatpush1.msra.mxu0 %v1365
    %1395 = vmatprep.subr.mxu0 0.0
    %1396 = vmatpush1.msra.mxu0 %v1366
    %1397 = vmatprep.subr.mxu0 0.0
    %1398 = vmatpush1.msra.mxu0 %v1367
    %1399 = vmatprep.subr.mxu0 0.0
    %1400 = vmatpush1.msra.mxu0 %v1368
    %1401 = vmatprep.subr.mxu0 0.0
    %1402 = vmatpush1.msra.mxu0 0.0
    %1403 = vmatprep.subr.mxu0 0.0
    %1404 = vmatpush1.msra.mxu0 0.0
    %1405 = vmatprep.subr.mxu0 0.0
    %1406 = vmatpush1.msra.mxu0 0.0
    %1407 = vmatprep.subr.mxu0 0.0
    %1408 = vmatpush1.msra.mxu0 0.0
    %1409 = vmatprep.subr.mxu0 0.0
    %1410 = vmatpush1.msra.mxu0 0.0
    %1411 = vmatprep.subr.mxu0 0.0
    %1412 = vmatpush1.msra.mxu0 0.0
    %1413 = vmatprep.subr.mxu0 0.0
    %1414 = vmatpush1.msra.mxu0 0.0
    %1415 = vmatprep.subr.mxu0 0.0
    %1416 = vmatpush1.msra.mxu0 0.0
    %1417 = vmatprep.subr.mxu0 0.0
    %1418 = vmatpush1.msra.mxu0 0.0
    %1419 = vmatprep.subr.mxu0 0.0
    %1420 = vmatpush1.msra.mxu0 0.0
    %1421 = vmatprep.subr.mxu0 0.0
    %1422 = vmatpush1.msra.mxu0 0.0
    %1423 = vmatprep.subr.mxu0 0.0
    %1424 = vmatpush1.msra.mxu0 0.0
    %1425 = vmatprep.subr.mxu0 0.0
    %1426 = vmatpush1.msra.mxu0 0.0
    %1427 = vmatprep.subr.mxu0 0.0
    %1428 = vmatpush1.msra.mxu0 0.0
    %1429 = vmatprep.subr.mxu0 0.0
    %1430 = vmatpush1.msra.mxu0 0.0
    %1431 = vmatprep.subr.mxu0 0.0
    %1432 = vmatpush1.msra.mxu0 0.0
    %1433 = vmatprep.mubr.f32.mxu0 0.0
    %1434 = vmatmul.mubr.f32.gmra.mrb[0].mxu0 %v1176
    %v1435 = vpop.f32.mrb[0].mxu0
    %v1436 = vadd.f32 0.0, %v1435
    %v1437 = vpop.f32.mrb[0].mxu0
    %1438 = vmatprep.mubr.f32.mxu0 0.0
    %1439 = vmatmul.mubr.f32.gmra.mrb[0].mxu0 %v1177
    %v1440 = vpop.f32.mrb[0].mxu0
    %v1441 = vadd.f32 0.0, %v1440
    %v1442 = vpop.f32.mrb[0].mxu0
    %1443 = vmatprep.mubr.f32.mxu0 0.0
    %1444 = vmatmul.mubr.f32.gmra.mrb[0].mxu0 %v1178
    %v1445 = vpop.f32.mrb[0].mxu0
    %v1446 = vadd.f32 0.0, %v1445
    %v1447 = vpop.f32.mrb[0].mxu0
    %1448 = vmatprep.mubr.f32.mxu0 0.0
    %1449 = vmatmul.mubr.f32.gmra.mrb[0].mxu0 %v1179
    %v1450 = vpop.f32.mrb[0].mxu0
    %v1451 = vadd.f32 0.0, %v1450
    %v1452 = vpop.f32.mrb[0].mxu0
    %1453 = vmatprep.mubr.f32.mxu0 0.0
    %1454 = vmatmul.mubr.f32.gmra.mrb[0].mxu0 %v1180
    %v1455 = vpop.f32.mrb[0].mxu0
    %v1456 = vadd.f32 0.0, %v1455
    %v1457 = vpop.f32.mrb[0].mxu0
    %1458 = vmatprep.mubr.f32.mxu0 0.0
    %1459 = vmatmul.mubr.f32.gmra.mrb[0].mxu0 %v1181
    %v1460 = vpop.f32.mrb[0].mxu0
    %v1461 = vadd.f32 0.0, %v1460
    %v1462 = vpop.f32.mrb[0].mxu0
    %1463 = vmatprep.mubr.f32.mxu0 0.0
    %1464 = vmatmul.mubr.f32.gmra.mrb[0].mxu0 %v1182
    %v1465 = vpop.f32.mrb[0].mxu0
    %v1466 = vadd.f32 0.0, %v1465
    %v1467 = vpop.f32.mrb[0].mxu0
    %1468 = vmatprep.mubr.f32.mxu0 0.0
    %1469 = vmatmul.mubr.f32.gmra.mrb[0].mxu0 %v1183
    %v1470 = vpop.f32.mrb[0].mxu0
    %v1471 = vadd.f32 0.0, %v1470
    %v1472 = vpop.f32.mrb[0].mxu0
    %1473 = vmatprep.mubr.f32.mxu0 0.0
    %1474 = vmatmul.mubr.f32.gmra.mrb[0].mxu0 %v1184
    %v1475 = vpop.f32.mrb[0].mxu0
    %v1476 = vadd.f32 0.0, %v1475
    %v1477 = vpop.f32.mrb[0].mxu0
    %1478 = vmatprep.mubr.f32.mxu0 0.0
    %1479 = vmatmul.mubr.f32.gmra.mrb[0].mxu0 %v1185
    %v1480 = vpop.f32.mrb[0].mxu0
    %v1481 = vadd.f32 0.0, %v1480
    %v1482 = vpop.f32.mrb[0].mxu0
    %1483 = vmatprep.mubr.f32.mxu0 0.0
    %1484 = vmatmul.mubr.f32.gmra.mrb[0].mxu0 %v1186
    %v1485 = vpop.f32.mrb[0].mxu0
    %v1486 = vadd.f32 0.0, %v1485
    %v1487 = vpop.f32.mrb[0].mxu0
    %1488 = vmatprep.mubr.f32.mxu0 0.0
    %1489 = vmatmul.mubr.f32.gmra.mrb[0].mxu0 %v1187
    %v1490 = vpop.f32.mrb[0].mxu0
    %v1491 = vadd.f32 0.0, %v1490
    %v1492 = vpop.f32.mrb[0].mxu0
    %1493 = vmatprep.mubr.f32.mxu0 0.0
    %1494 = vmatmul.mubr.f32.gmra.mrb[0].mxu0 %v1188
    %v1495 = vpop.f32.mrb[0].mxu0
    %v1496 = vadd.f32 0.0, %v1495
    %v1497 = vpop.f32.mrb[0].mxu0
    %1498 = vmatprep.mubr.f32.mxu0 0.0
    %1499 = vmatmul.mubr.f32.gmra.mrb[0].mxu0 %v1189
    %v1500 = vpop.f32.mrb[0].mxu0
    %v1501 = vadd.f32 0.0, %v1500
    %v1502 = vpop.f32.mrb[0].mxu0
    %1503 = vmatprep.mubr.f32.mxu0 0.0
    %1504 = vmatmul.mubr.f32.gmra.mrb[0].mxu0 %v1190
    %v1505 = vpop.f32.mrb[0].mxu0
    %v1506 = vadd.f32 0.0, %v1505
    %v1507 = vpop.f32.mrb[0].mxu0
    %1508 = vmatprep.mubr.f32.mxu0 0.0
    %1509 = vmatmul.mubr.f32.gmra.mrb[0].mxu0 %v1191
    %v1510 = vpop.f32.mrb[0].mxu0
    %v1511 = vadd.f32 0.0, %v1510
    %v1512 = vpop.f32.mrb[0].mxu0
    %1513 = vdwg.mxu0
    %1514 = vmatprep.subr.mxu0 0.0
    %1515 = vmatpush1.msra.mxu0 %v1337
    %1516 = vmatprep.subr.mxu0 0.0
    %1517 = vmatpush1.msra.mxu0 %v1338
    %1518 = vmatprep.subr.mxu0 0.0
    %1519 = vmatpush1.msra.mxu0 %v1339
    %1520 = vmatprep.subr.mxu0 0.0
    %1521 = vmatpush1.msra.mxu0 %v1340
    %1522 = vmatprep.subr.mxu0 0.0
    %1523 = vmatpush1.msra.mxu0 %v1341
    %1524 = vmatprep.subr.mxu0 0.0
    %1525 = vmatpush1.msra.mxu0 %v1342
    %1526 = vmatprep.subr.mxu0 0.0
    %1527 = vmatpush1.msra.mxu0 %v1343
    %1528 = vmatprep.subr.mxu0 0.0
    %1529 = vmatpush1.msra.mxu0 %v1344
    %1530 = vmatprep.subr.mxu0 0.0
    %1531 = vmatpush1.msra.mxu0 %v1345
    %1532 = vmatprep.subr.mxu0 0.0
    %1533 = vmatpush1.msra.mxu0 %v1346
    %1534 = vmatprep.subr.mxu0 0.0
    %1535 = vmatpush1.msra.mxu0 %v1347
    %1536 = vmatprep.subr.mxu0 0.0
    %1537 = vmatpush1.msra.mxu0 %v1348
    %1538 = vmatprep.subr.mxu0 0.0
    %1539 = vmatpush1.msra.mxu0 %v1349
    %1540 = vmatprep.subr.mxu0 0.0
    %1541 = vmatpush1.msra.mxu0 %v1350
    %1542 = vmatprep.subr.mxu0 0.0
    %1543 = vmatpush1.msra.mxu0 %v1351
    %1544 = vmatprep.subr.mxu0 0.0
    %1545 = vmatpush1.msra.mxu0 %v1352
    %1546 = vmatprep.subr.mxu0 0.0
    %1547 = vmatpush1.msra.mxu0 0.0
    %1548 = vmatprep.subr.mxu0 0.0
    %1549 = vmatpush1.msra.mxu0 0.0
    %1550 = vmatprep.subr.mxu0 0.0
    %1551 = vmatpush1.msra.mxu0 0.0
    %1552 = vmatprep.subr.mxu0 0.0
    %1553 = vmatpush1.msra.mxu0 0.0
    %1554 = vmatprep.subr.mxu0 0.0
    %1555 = vmatpush1.msra.mxu0 0.0
    %1556 = vmatprep.subr.mxu0 0.0
    %1557 = vmatpush1.msra.mxu0 0.0
    %1558 = vmatprep.subr.mxu0 0.0
    %1559 = vmatpush1.msra.mxu0 0.0
    %1560 = vmatprep.subr.mxu0 0.0
    %1561 = vmatpush1.msra.mxu0 0.0
    %1562 = vmatprep.subr.mxu0 0.0
    %1563 = vmatpush1.msra.mxu0 0.0
    %1564 = vmatprep.subr.mxu0 0.0
    %1565 = vmatpush1.msra.mxu0 0.0
    %1566 = vmatprep.subr.mxu0 0.0
    %1567 = vmatpush1.msra.mxu0 0.0
    %1568 = vmatprep.subr.mxu0 0.0
    %1569 = vmatpush1.msra.mxu0 0.0
    %1570 = vmatprep.subr.mxu0 0.0
    %1571 = vmatpush1.msra.mxu0 0.0
    %1572 = vmatprep.subr.mxu0 0.0
    %1573 = vmatpush1.msra.mxu0 0.0
    %1574 = vmatprep.subr.mxu0 0.0
    %1575 = vmatpush1.msra.mxu0 0.0
    %1576 = vmatprep.subr.mxu0 0.0
    %1577 = vmatpush1.msra.mxu0 0.0
    %1578 = vmatprep.mubr.f32.mxu0 0.0
    %1579 = vmatmul.mubr.f32.gmra.mrb[0].mxu0 %v1259
    %v1580 = vpop.f32.mrb[0].mxu0
    %v1581 = vadd.f32 %v1436, %v1580
    %v1582 = vpop.f32.mrb[0].mxu0
    %1583 = vmatprep.mubr.f32.mxu0 0.0
    %1584 = vmatmul.mubr.f32.gmra.mrb[0].mxu0 %v1264
    %v1585 = vpop.f32.mrb[0].mxu0
    %v1586 = vadd.f32 %v1441, %v1585
    %v1587 = vpop.f32.mrb[0].mxu0
    %1588 = vmatprep.mubr.f32.mxu0 0.0
    %1589 = vmatmul.mubr.f32.gmra.mrb[0].mxu0 %v1269
    %v1590 = vpop.f32.mrb[0].mxu0
    %v1591 = vadd.f32 %v1446, %v1590
    %v1592 = vpop.f32.mrb[0].mxu0
    %1593 = vmatprep.mubr.f32.mxu0 0.0
    %1594 = vmatmul.mubr.f32.gmra.mrb[0].mxu0 %v1274
    %v1595 = vpop.f32.mrb[0].mxu0
    %v1596 = vadd.f32 %v1451, %v1595
    %v1597 = vpop.f32.mrb[0].mxu0
    %1598 = vmatprep.mubr.f32.mxu0 0.0
    %1599 = vmatmul.mubr.f32.gmra.mrb[0].mxu0 %v1279
    %v1600 = vpop.f32.mrb[0].mxu0
    %v1601 = vadd.f32 %v1456, %v1600
    %v1602 = vpop.f32.mrb[0].mxu0
    %1603 = vmatprep.mubr.f32.mxu0 0.0
    %1604 = vmatmul.mubr.f32.gmra.mrb[0].mxu0 %v1284
    %v1605 = vpop.f32.mrb[0].mxu0
    %v1606 = vadd.f32 %v1461, %v1605
    %v1607 = vpop.f32.mrb[0].mxu0
    %1608 = vmatprep.mubr.f32.mxu0 0.0
    %1609 = vmatmul.mubr.f32.gmra.mrb[0].mxu0 %v1289
    %v1610 = vpop.f32.mrb[0].mxu0
    %v1611 = vadd.f32 %v1466, %v1610
    %v1612 = vpop.f32.mrb[0].mxu0
    %1613 = vmatprep.mubr.f32.mxu0 0.0
    %1614 = vmatmul.mubr.f32.gmra.mrb[0].mxu0 %v1294
    %v1615 = vpop.f32.mrb[0].mxu0
    %v1616 = vadd.f32 %v1471, %v1615
    %v1617 = vpop.f32.mrb[0].mxu0
    %1618 = vmatprep.mubr.f32.mxu0 0.0
    %1619 = vmatmul.mubr.f32.gmra.mrb[0].mxu0 %v1299
    %v1620 = vpop.f32.mrb[0].mxu0
    %v1621 = vadd.f32 %v1476, %v1620
    %v1622 = vpop.f32.mrb[0].mxu0
    %1623 = vmatprep.mubr.f32.mxu0 0.0
    %1624 = vmatmul.mubr.f32.gmra.mrb[0].mxu0 %v1304
    %v1625 = vpop.f32.mrb[0].mxu0
    %v1626 = vadd.f32 %v1481, %v1625
    %v1627 = vpop.f32.mrb[0].mxu0
    %1628 = vmatprep.mubr.f32.mxu0 0.0
    %1629 = vmatmul.mubr.f32.gmra.mrb[0].mxu0 %v1309
    %v1630 = vpop.f32.mrb[0].mxu0
    %v1631 = vadd.f32 %v1486, %v1630
    %v1632 = vpop.f32.mrb[0].mxu0
    %1633 = vmatprep.mubr.f32.mxu0 0.0
    %1634 = vmatmul.mubr.f32.gmra.mrb[0].mxu0 %v1314
    %v1635 = vpop.f32.mrb[0].mxu0
    %v1636 = vadd.f32 %v1491, %v1635
    %v1637 = vpop.f32.mrb[0].mxu0
    %1638 = vmatprep.mubr.f32.mxu0 0.0
    %1639 = vmatmul.mubr.f32.gmra.mrb[0].mxu0 %v1319
    %v1640 = vpop.f32.mrb[0].mxu0
    %v1641 = vadd.f32 %v1496, %v1640
    %v1642 = vpop.f32.mrb[0].mxu0
    %1643 = vmatprep.mubr.f32.mxu0 0.0
    %1644 = vmatmul.mubr.f32.gmra.mrb[0].mxu0 %v1324
    %v1645 = vpop.f32.mrb[0].mxu0
    %v1646 = vadd.f32 %v1501, %v1645
    %v1647 = vpop.f32.mrb[0].mxu0
    %1648 = vmatprep.mubr.f32.mxu0 0.0
    %1649 = vmatmul.mubr.f32.gmra.mrb[0].mxu0 %v1329
    %v1650 = vpop.f32.mrb[0].mxu0
    %v1651 = vadd.f32 %v1506, %v1650
    %v1652 = vpop.f32.mrb[0].mxu0
    %1653 = vmatprep.mubr.f32.mxu0 0.0
    %1654 = vmatmul.mubr.f32.gmra.mrb[0].mxu0 %v1334
    %v1655 = vpop.f32.mrb[0].mxu0
    %v1656 = vadd.f32 %v1511, %v1655
    %v1657 = vpop.f32.mrb[0].mxu0
    %1658 = vdwg.mxu0
    %v1659 = vld [vmem:[%s10] sm:$0x1]
    %v1661 = vlaneseq
    %v1662 = vshrl.u32 %v1661, 7
    %v1663 = vsub.s32 0, %v1662
    %v1664 = vrot.slane %v1659, %v1663
    %v1666 = vadd.f32 %v1581, %v1664
    %v1667 = vadd.f32 %v1586, %v1664
    %v1668 = vadd.f32 %v1591, %v1664
    %v1669 = vadd.f32 %v1596, %v1664
    %v1670 = vadd.f32 %v1601, %v1664
    %v1671 = vadd.f32 %v1606, %v1664
    %v1672 = vadd.f32 %v1611, %v1664
    %v1673 = vadd.f32 %v1616, %v1664
    %v1674 = vadd.f32 %v1621, %v1664
    %v1675 = vadd.f32 %v1626, %v1664
    %v1676 = vadd.f32 %v1631, %v1664
    %v1677 = vadd.f32 %v1636, %v1664
    %v1678 = vadd.f32 %v1641, %v1664
    %v1679 = vadd.f32 %v1646, %v1664
    %v1680 = vadd.f32 %v1651, %v1664
    %v1681 = vadd.f32 %v1656, %v1664
    %1682 = vst [vmem:[#allocation16] sm:$0xff] %v1666
    %1683 = vst [vmem:[#allocation16 + $0x8] sm:$0xff] %v1667
    %1684 = vst [vmem:[#allocation16 + $0x10] sm:$0xff] %v1668
    %1685 = vst [vmem:[#allocation16 + $0x18] sm:$0xff] %v1669
    %1686 = vst [vmem:[#allocation16 + $0x20] sm:$0xff] %v1670
    %1687 = vst [vmem:[#allocation16 + $0x28] sm:$0xff] %v1671
    %1688 = vst [vmem:[#allocation16 + $0x30] sm:$0xff] %v1672
    %1689 = vst [vmem:[#allocation16 + $0x38] sm:$0xff] %v1673
    %1690 = vst [vmem:[#allocation16 + $0x40] sm:$0xff] %v1674
    %1691 = vst [vmem:[#allocation16 + $0x48] sm:$0xff] %v1675
    %1692 = vst [vmem:[#allocation16 + $0x50] sm:$0xff] %v1676
    %1693 = vst [vmem:[#allocation16 + $0x58] sm:$0xff] %v1677
    %1694 = vst [vmem:[#allocation16 + $0x60] sm:$0xff] %v1678
    %1695 = vst [vmem:[#allocation16 + $0x68] sm:$0xff] %v1679
    %1696 = vst [vmem:[#allocation16 + $0x70] sm:$0xff] %v1680
    %1697 = vst [vmem:[#allocation16 + $0x78] sm:$0xff] %v1681
    // Predicated region
    $region78: #{tpu_custom_call.1} parent=1 // pred_check
      _
    $region79: #{tpu_custom_call.1} parent=1 // pred_check_branch
      %1699 = sbr.rel (0) target = $region81
    $region80: #{tpu_custom_call.1} parent=1 // pred_region
      %s1701 = ssub.s32 2048, 2048
      %1702 = vsyncadd [#allocation4], %s1701
      %s1703 = sshll.u32 [#allocation16], 4
      %s1704 = int_to_ptr.vmem [resolvable:$true] %s1703
      %1709 = dma.vmem_to_hbm [thread:$0]  %s1704, 2048, %s11, [#allocation4], 128, 128, 8
    $region81: #{tpu_custom_call.1} parent=1 // pred_fallthru
      _
    // Predicated region
    $region82: #{tpu_custom_call.1} parent=1 // pred_check
      _
    $region83: #{tpu_custom_call.1} parent=1 // pred_check_branch
      %1711 = sbr.rel (0) target = $region85
    $region84: #{tpu_custom_call.1} parent=1 // pred_region
      %1712 = dma.done [#allocation4], 2048
    $region85: #{tpu_custom_call.1} parent=1 // pred_fallthru
      _
    %1713 = vsyncpa [#allocation3], 1
    %1714 = vsyncpa [#allocation6], 1
    %1715 = vsyncpa [#allocation9], 1
    %1716 = vsyncpa [#allocation12], 1
    %1717 = vsyncpa [#allocation15], 1
    %1718 = vsyncpa [#allocation4], 1

</llo_original>
